<compile_context>
chip_gen: v7x
topology: tpu7x:2x2x1
jax: 0.10.0
libtpu: 0.0.40
codegen_flags: <defaults>
</compile_context>

<pallas_src>
import jax
import jax.numpy as jnp
import numpy as np
from jax.experimental import pallas as pl
from jax.experimental.pallas import tpu as pltpu

LATENT = 16  # fixed in the PyTorch module (self.latent = 16)


def dip_c_kernel(x_ref, wih_ref, whh_ref, bihf_ref, bhhn_ref,
                 wtl_ref, wto_ref, wv_ref, expe_ref, fold_ref,
                 w1a_ref, w1b_ref, b1_ref, w2bd_ref, b2t_ref,
                 out1_ref, out2_ref):
    """One batch tile of the full Dip_c forward pass, entirely in VMEM.

    x_ref:    (1, T*TB, D)        time-major rows (row = t*TB + b) for this batch tile
    wih_ref:  (D, 3H)             GRU input weights (pre-transposed), gate order [r, z, n]
    whh_ref:  (H, 3H)             GRU hidden weights (pre-transposed)
    bihf_ref: (1, 3H)             b_ih with b_hh pre-folded into the r/z columns
    bhhn_ref: (1, H)              b_hh for the n gate (must stay inside r * (...))
    wtl_ref:  (H, (T-1)*L)        attention_t "last state" slice, tiled along lanes per t
    wto_ref:  ((T-1)*H, (T-1)*L)  block-diagonal attention_t "out" slice
    wv_ref:   ((T-1)*L, T-1)      block-diagonal attention_v weight
    expe_ref: (T-1, (T-1)*H)      expands attn[b, t] across the H lanes of timestep t
    fold_ref: ((T-1)*H, H)        folds the per-timestep context back to (TB, H)
    w1a/w1b:  (H, O)              linear1 split into [last_out | sum_context] halves
    b1:       (1, O)
    w2bd_ref: (T*H, T*H)          block-diagonal linear2 weight (per-t blocks of w2.T)
    b2t_ref:  (1, T*H)            linear2 bias tiled per timestep
    out1_ref: (TB, O)             sigmoid output
    out2_ref: (TB, T*H)           linear2(rnn_out), lane-dense slab
    """
    TB = out1_ref.shape[0]
    H = whh_ref.shape[0]
    T = b2t_ref.shape[1] // H

    x2 = x_ref[0]                                    # (T*TB, D)
    whh = whh_ref[...]
    bhh_n = bhhn_ref[...]

    # ---- hoisted input projection: one matmul for all T timesteps ----
    gi_all = (jnp.dot(x2, wih_ref[...], preferred_element_type=jnp.float32)
              + bihf_ref[...])                       # (T*TB, 3H)

    # ---- GRU recurrence (PyTorch gate order r, z, n), statically unrolled ----
    hs = []
    h = None
    for t in range(T):
        gi = gi_all[t * TB:(t + 1) * TB, :]          # sublane-aligned static slice
        if t == 0:                                   # h0 == 0: skip the h @ whh matmul
            rz = jax.nn.sigmoid(gi[:, :2 * H])
            r, z = rz[:, :H], rz[:, H:]
            h = (1.0 - z) * jnp.tanh(gi[:, 2 * H:] + r * bhh_n)
        else:
            gh = jnp.dot(h, whh, preferred_element_type=jnp.float32)
            rz = jax.nn.sigmoid(gi[:, :2 * H] + gh[:, :2 * H])
            r, z = rz[:, :H], rz[:, H:]
            n = jnp.tanh(gi[:, 2 * H:] + r * (gh[:, 2 * H:] + bhh_n))
            h = (1.0 - z) * n + z * h
        hs.append(h)

    h_all = jnp.concatenate(hs, axis=1)              # (TB, T*H), lane-major in t
    h_prefix = h_all[:, :(T - 1) * H]                # (TB, (T-1)*H)
    last = hs[-1]                                    # (TB, H)

    # ---- concatenation attention over the first T-1 states: 3 batched matmuls ----
    att = jnp.tanh(
        jnp.dot(last, wtl_ref[...], preferred_element_type=jnp.float32)
        + jnp.dot(h_prefix, wto_ref[...], preferred_element_type=jnp.float32))
    scores = jnp.dot(att, wv_ref[...], preferred_element_type=jnp.float32)   # (TB, T-1)
    scores = scores - jnp.max(scores, axis=1, keepdims=True)
    e = jnp.exp(scores)
    attn = e * pl.reciprocal(jnp.sum(e, axis=1, keepdims=True), approx=True)

    # ---- attention-weighted context sum as one expand -> mul -> fold contraction ----
    attn_lanes = jnp.dot(attn, expe_ref[...], preferred_element_type=jnp.float32)
    sum_ctx = jnp.dot(attn_lanes * h_prefix, fold_ref[...],
                      preferred_element_type=jnp.float32)                    # (TB, H)

    # ---- linear1([last_out, sum_context]) + sigmoid ----
    logits = (jnp.dot(last, w1a_ref[...], preferred_element_type=jnp.float32)
              + jnp.dot(sum_ctx, w1b_ref[...], preferred_element_type=jnp.float32)
              + b1_ref[...])
    out1_ref[...] = jax.nn.sigmoid(logits)

    # ---- linear2(rnn_out) for every timestep: one lane-dense matmul ----
    out2_ref[...] = (jnp.dot(h_all, w2bd_ref[...], preferred_element_type=jnp.float32)
                     + b2t_ref[...])


def dip_c_forward(x, params, hidden_dim, output_dim, batch_tile=None):
    """x: (B, T, input_dim) float32. Returns (sigmoid output (B,O), linear2(rnn_out) (B,T,H))."""
    B, T, D = x.shape
    H, O, L = hidden_dim, output_dim, LATENT
    assert T >= 2, "Dip_c attention requires at least 2 timesteps"

    f32 = jnp.float32
    Bp = 8 * ((B + 7) // 8)                          # pad batch to a sublane multiple
    if batch_tile is None:
        TB = Bp
    else:
        TB = max(8, 8 * ((batch_tile + 7) // 8))
        if Bp % TB != 0:
            TB = Bp
    nt = Bp // TB

    xf = x.astype(f32)
    if Bp != B:
        xf = jnp.concatenate([xf, jnp.zeros((Bp - B, T, D), f32)], axis=0)
    # (Bp,T,D) -> (T,Bp,D) -> (nt, T*TB, D); rows inside a tile ordered t*TB + b_local.
    x_tiles = (jnp.transpose(xf, (1, 0, 2))
               .reshape(T, nt, TB, D)
               .transpose(1, 0, 2, 3)
               .reshape(nt, T * TB, D))

    # ---- GRU weights: pre-transpose, fuse r/z biases ----
    w_ih = params['w_ih'].astype(f32)                # (3H, D)
    w_hh = params['w_hh'].astype(f32)                # (3H, H)
    b_ih = params['b_ih'].astype(f32)
    b_hh = params['b_hh'].astype(f32)
    wih_T = w_ih.T                                   # (D, 3H)
    whh_T = w_hh.T                                   # (H, 3H)
    bih_fused = jnp.concatenate([b_ih[:2 * H] + b_hh[:2 * H], b_ih[2 * H:]])[None, :]
    bhh_n = b_hh[2 * H:][None, :]                    # (1, H)

    # ---- attention weights: tiled / block-diagonal so all timesteps batch into one matmul ----
    Tm1 = T - 1
    eye_t = jnp.eye(Tm1, dtype=f32)
    wt = params['w_att_t'].astype(f32)               # (L, 2H)
    wt_last = wt[:, :H].T                            # (H, L)   acts on the repeated last state
    wt_out = wt[:, H:].T                             # (H, L)   acts on out (h_t)
    wv = params['w_att_v'].astype(f32).T             # (L, 1)
    wt_last_tiled = jnp.tile(wt_last, (1, Tm1))                              # (H, Tm1*L)
    wt_out_bd = jnp.kron(eye_t, wt_out)                                      # (Tm1*H, Tm1*L)
    wv_bd = jnp.kron(eye_t, wv)                                              # (Tm1*L, Tm1)
    expand_e = jnp.kron(eye_t, jnp.ones((1, H), f32))                        # (Tm1, Tm1*H)
    fold_f = jnp.kron(jnp.ones((Tm1, 1), f32), jnp.eye(H, dtype=f32))        # (Tm1*H, H)

    # ---- output heads ----
    w1 = params['w1'].astype(f32)                    # (O, 2H)
    w1a_T = w1[:, :H].T                              # (H, O)
    w1b_T = w1[:, H:].T                              # (H, O)
    b1 = params['b1'].astype(f32)[None, :]           # (1, O)
    w2 = params['w2'].astype(f32)                    # (H, H)
    w2_bd = jnp.kron(jnp.eye(T, dtype=f32), w2.T)                            # (T*H, T*H)
    b2_tiled = jnp.tile(params['b2'].astype(f32)[None, :], (1, T))           # (1, T*H)

    consts = [wih_T, whh_T, bih_fused, bhh_n, wt_last_tiled, wt_out_bd, wv_bd,
              expand_e, fold_f, w1a_T, w1b_T, b1, w2_bd, b2_tiled]

    def const_spec(shape):
        nd = len(shape)
        return pl.BlockSpec(shape, lambda i, _nd=nd: (0,) * _nd)

    in_specs = ([pl.BlockSpec((1, T * TB, D), lambda i: (i, 0, 0))]
                + [const_spec(c.shape) for c in consts])
    out_specs = (pl.BlockSpec((TB, O), lambda i: (i, 0)),
                 pl.BlockSpec((TB, T * H), lambda i: (i, 0)))
    out_shapes = (jax.ShapeDtypeStruct((Bp, O), f32),
                  jax.ShapeDtypeStruct((Bp, T * H), f32))

    out1_p, out2_p = pl.pallas_call(
        dip_c_kernel,
        grid=(nt,),
        in_specs=in_specs,
        out_specs=out_specs,
        out_shape=out_shapes,
        compiler_params=pltpu.CompilerParams(dimension_semantics=("parallel",)),
    )(x_tiles, *consts)

    out1 = out1_p[:B]
    out2 = out2_p[:B].reshape(B, T, H)
    return out1, out2


def ref_forward(x, params, H):
    """Pure-JAX reference mirroring the PyTorch forward (bi_direction=False, sigmoid)."""
    B, T, D = x.shape
    w_ih, w_hh = params['w_ih'], params['w_hh']
    b_ih, b_hh = params['b_ih'], params['b_hh']

    def cell(h, x_t):
        gi = x_t @ w_ih.T + b_ih
        gh = h @ w_hh.T + b_hh
        r = jax.nn.sigmoid(gi[:, :H] + gh[:, :H])
        z = jax.nn.sigmoid(gi[:, H:2 * H] + gh[:, H:2 * H])
        n = jnp.tanh(gi[:, 2 * H:] + r * gh[:, 2 * H:])
        h_new = (1.0 - z) * n + z * h
        return h_new, h_new

    _, hs = jax.lax.scan(cell, jnp.zeros((B, H), jnp.float32),
                         jnp.transpose(x, (1, 0, 2)))
    rnn_out = jnp.transpose(hs, (1, 0, 2))                               # (B, T, H)
    out = rnn_out[:, :-1, :]
    last = rnn_out[:, -1, :]
    re_ht = jnp.broadcast_to(last[:, None, :], (B, T - 1, H))
    concat = jnp.concatenate([re_ht, out], axis=2)                       # (B, T-1, 2H)
    att = jnp.tanh(concat @ params['w_att_t'].T)                         # (B, T-1, LATENT)
    att = att @ params['w_att_v'].T                                      # (B, T-1, 1)
    a = jax.nn.softmax(att, axis=1)
    sum_ctx = jnp.sum(a * out, axis=1)                                   # (B, H)
    cat2 = jnp.concatenate([last, sum_ctx], axis=1)                      # (B, 2H)
    out1 = jax.nn.sigmoid(cat2 @ params['w1'].T + params['b1'])
    out2 = rnn_out @ params['w2'].T + params['b2']
    return out1, out2


def make_params(key, input_dim, hidden_dim, output_dim):
    H, D, O = hidden_dim, input_dim, output_dim
    ks = jax.random.split(key, 11)
    s = 1.0 / np.sqrt(H)
    u = lambda k, shape, sc: jax.random.uniform(k, shape, jnp.float32, -sc, sc)
    return {
        'w_ih':   u(ks[0], (3 * H, D), s),
        'w_hh':   u(ks[1], (3 * H, H), s),
        'b_ih':   u(ks[2], (3 * H,), s),
        'b_hh':   u(ks[3], (3 * H,), s),
        'w_att_t': u(ks[4], (LATENT, 2 * H), 1.0 / np.sqrt(2 * H)),
        'w_att_v': u(ks[5], (1, LATENT), 1.0 / np.sqrt(LATENT)),
        'w1':     u(ks[6], (O, 2 * H), 1.0 / np.sqrt(2 * H)),
        'b1':     u(ks[7], (O,), 1.0 / np.sqrt(2 * H)),
        'w2':     u(ks[8], (H, H), s),
        'b2':     u(ks[9], (H,), s),
    }


if __name__ == "__main__":
    # Shapes consistent with the module: batch=2, max_timesteps=8, input_dim=8,
    # hidden_dim=32, output_dim=8, bi_direction=False.
    B, T, D, H, O = 2, 8, 8, 32, 8

    key = jax.random.PRNGKey(0)
    kp, kx = jax.random.split(key)
    params = make_params(kp, D, H, O)
    x = jax.random.normal(kx, (B, T, D), dtype=jnp.float32)

    out1, out2 = dip_c_forward(x, params, hidden_dim=H, output_dim=O)
    jax.block_until_ready((out1, out2))

    ref1, ref2 = ref_forward(x, params, H)
    jax.block_until_ready((ref1, ref2))

    assert out1.shape == (B, O) and out2.shape == (B, T, H)
    assert np.all(np.isfinite(np.asarray(out1))) and np.all(np.isfinite(np.asarray(out2)))
    np.testing.assert_allclose(np.asarray(out1), np.asarray(ref1), rtol=1e-2, atol=1e-2)
    np.testing.assert_allclose(np.asarray(out2), np.asarray(ref2), rtol=1e-2, atol=1e-2)

    print("KERNEL_OK")
</pallas_src>

<mosaic_0001>
module attributes {stable_mosaic.version = 11 : i64} {
  func.func @dip_c_kernel(%arg0: i32, %arg1: memref<1x64x8xf32, #tpu.memory_space<vmem>>, %arg2: memref<8x96xf32, #tpu.memory_space<vmem>>, %arg3: memref<32x96xf32, #tpu.memory_space<vmem>>, %arg4: memref<1x96xf32, #tpu.memory_space<vmem>>, %arg5: memref<1x32xf32, #tpu.memory_space<vmem>>, %arg6: memref<32x112xf32, #tpu.memory_space<vmem>>, %arg7: memref<224x112xf32, #tpu.memory_space<vmem>>, %arg8: memref<112x7xf32, #tpu.memory_space<vmem>>, %arg9: memref<7x224xf32, #tpu.memory_space<vmem>>, %arg10: memref<224x32xf32, #tpu.memory_space<vmem>>, %arg11: memref<32x8xf32, #tpu.memory_space<vmem>>, %arg12: memref<32x8xf32, #tpu.memory_space<vmem>>, %arg13: memref<1x8xf32, #tpu.memory_space<vmem>>, %arg14: memref<256x256xf32, #tpu.memory_space<vmem>>, %arg15: memref<1x256xf32, #tpu.memory_space<vmem>>, %arg16: memref<8x8xf32, #tpu.memory_space<vmem>>, %arg17: memref<8x256xf32, #tpu.memory_space<vmem>>) attributes {dimension_semantics = [#tpu.dimension_semantics<parallel>], iteration_bounds = array<i64: 1>, scalar_prefetch = 0 : i64, scratch_operands = 0 : i64, tpu.core_type = #tpu.core_type<tc>, window_params = [{transform_indices = @transform_0, window_bounds = array<i64: 1, 64, 8>}, {pipeline_mode = #tpu.pipeline_mode<synchronous>, transform_indices = @transform_1, window_bounds = array<i64: 8, 96>}, {pipeline_mode = #tpu.pipeline_mode<synchronous>, transform_indices = @transform_2, window_bounds = array<i64: 32, 96>}, {pipeline_mode = #tpu.pipeline_mode<synchronous>, transform_indices = @transform_3, window_bounds = array<i64: 1, 96>}, {pipeline_mode = #tpu.pipeline_mode<synchronous>, transform_indices = @transform_4, window_bounds = array<i64: 1, 32>}, {pipeline_mode = #tpu.pipeline_mode<synchronous>, transform_indices = @transform_5, window_bounds = array<i64: 32, 112>}, {pipeline_mode = #tpu.pipeline_mode<synchronous>, transform_indices = @transform_6, window_bounds = array<i64: 224, 112>}, {pipeline_mode = #tpu.pipeline_mode<synchronous>, transform_indices = @transform_7, window_bounds = array<i64: 112, 7>}, {pipeline_mode = #tpu.pipeline_mode<synchronous>, transform_indices = @transform_8, window_bounds = array<i64: 7, 224>}, {pipeline_mode = #tpu.pipeline_mode<synchronous>, transform_indices = @transform_9, window_bounds = array<i64: 224, 32>}, {pipeline_mode = #tpu.pipeline_mode<synchronous>, transform_indices = @transform_10, window_bounds = array<i64: 32, 8>}, {pipeline_mode = #tpu.pipeline_mode<synchronous>, transform_indices = @transform_11, window_bounds = array<i64: 32, 8>}, {pipeline_mode = #tpu.pipeline_mode<synchronous>, transform_indices = @transform_12, window_bounds = array<i64: 1, 8>}, {pipeline_mode = #tpu.pipeline_mode<synchronous>, transform_indices = @transform_13, window_bounds = array<i64: 256, 256>}, {pipeline_mode = #tpu.pipeline_mode<synchronous>, transform_indices = @transform_14, window_bounds = array<i64: 1, 256>}, {transform_indices = @transform_15, window_bounds = array<i64: 8, 8>}, {transform_indices = @transform_16, window_bounds = array<i64: 8, 256>}]} {
    %c0 = arith.constant 0 : index
    %c0_0 = arith.constant 0 : index
    %c0_1 = arith.constant 0 : index
    %0 = vector.load %arg1[%c0, %c0_0, %c0_1] : memref<1x64x8xf32, #tpu.memory_space<vmem>>, vector<1x64x8xf32>
    %1 = vector.shape_cast %0 : vector<1x64x8xf32> to vector<64x8xf32>
    %c0_2 = arith.constant 0 : index
    %c0_3 = arith.constant 0 : index
    %2 = vector.load %arg3[%c0_2, %c0_3] : memref<32x96xf32, #tpu.memory_space<vmem>>, vector<32x96xf32>
    %c0_4 = arith.constant 0 : index
    %c0_5 = arith.constant 0 : index
    %3 = vector.load %arg5[%c0_4, %c0_5] : memref<1x32xf32, #tpu.memory_space<vmem>>, vector<1x32xf32>
    %c0_6 = arith.constant 0 : index
    %c0_7 = arith.constant 0 : index
    %4 = vector.load %arg2[%c0_6, %c0_7] : memref<8x96xf32, #tpu.memory_space<vmem>>, vector<8x96xf32>
    %cst = arith.constant dense<0.000000e+00> : vector<64x96xf32>
    %5 = tpu.matmul %1, %4, %cst {dimension_numbers = #tpu.dot_dimension_numbers<[1], [0], [0], [1], [0, 0, 1, 1], [], []>} : vector<64x8xf32>, vector<8x96xf32>, vector<64x96xf32> -> vector<64x96xf32>
    %c0_8 = arith.constant 0 : index
    %c0_9 = arith.constant 0 : index
    %6 = vector.load %arg4[%c0_8, %c0_9] : memref<1x96xf32, #tpu.memory_space<vmem>>, vector<1x96xf32>
    %7 = vector.broadcast %6 : vector<1x96xf32> to vector<64x96xf32>
    %8 = arith.addf %5, %7 : vector<64x96xf32>
    %9 = vector.extract_strided_slice %8 {offsets = [0, 0], sizes = [8, 96], strides = [1, 1]} : vector<64x96xf32> to vector<8x96xf32>
    %10 = vector.extract_strided_slice %9 {offsets = [0, 0], sizes = [8, 64], strides = [1, 1]} : vector<8x96xf32> to vector<8x64xf32>
    %11 = arith.negf %10 : vector<8x64xf32>
    %12 = math.exp %11 : vector<8x64xf32>
    %cst_10 = arith.constant 1.000000e+00 : f32
    %13 = vector.broadcast %cst_10 : f32 to vector<8x64xf32>
    %14 = arith.addf %13, %12 : vector<8x64xf32>
    %15 = arith.divf %13, %14 : vector<8x64xf32>
    %16 = vector.extract_strided_slice %15 {offsets = [0, 0], sizes = [8, 32], strides = [1, 1]} : vector<8x64xf32> to vector<8x32xf32>
    %17 = vector.extract_strided_slice %15 {offsets = [0, 32], sizes = [8, 32], strides = [1, 1]} : vector<8x64xf32> to vector<8x32xf32>
    %cst_11 = arith.constant 1.000000e+00 : f32
    %18 = vector.broadcast %cst_11 : f32 to vector<8x32xf32>
    %19 = arith.subf %18, %17 : vector<8x32xf32>
    %20 = vector.extract_strided_slice %9 {offsets = [0, 64], sizes = [8, 32], strides = [1, 1]} : vector<8x96xf32> to vector<8x32xf32>
    %21 = vector.broadcast %3 : vector<1x32xf32> to vector<8x32xf32>
    %22 = arith.mulf %16, %21 : vector<8x32xf32>
    %23 = arith.addf %20, %22 : vector<8x32xf32>
    %24 = math.tanh %23 : vector<8x32xf32>
    %25 = arith.mulf %19, %24 : vector<8x32xf32>
    %26 = vector.extract_strided_slice %8 {offsets = [8, 0], sizes = [8, 96], strides = [1, 1]} : vector<64x96xf32> to vector<8x96xf32>
    %cst_12 = arith.constant dense<0.000000e+00> : vector<8x96xf32>
    %27 = tpu.matmul %25, %2, %cst_12 {dimension_numbers = #tpu.dot_dimension_numbers<[1], [0], [0], [1], [0, 0, 1, 1], [], []>} : vector<8x32xf32>, vector<32x96xf32>, vector<8x96xf32> -> vector<8x96xf32>
    %28 = vector.extract_strided_slice %26 {offsets = [0, 0], sizes = [8, 64], strides = [1, 1]} : vector<8x96xf32> to vector<8x64xf32>
    %29 = vector.extract_strided_slice %27 {offsets = [0, 0], sizes = [8, 64], strides = [1, 1]} : vector<8x96xf32> to vector<8x64xf32>
    %30 = arith.addf %28, %29 : vector<8x64xf32>
    %31 = arith.negf %30 : vector<8x64xf32>
    %32 = math.exp %31 : vector<8x64xf32>
    %cst_13 = arith.constant 1.000000e+00 : f32
    %33 = vector.broadcast %cst_13 : f32 to vector<8x64xf32>
    %34 = arith.addf %33, %32 : vector<8x64xf32>
    %35 = arith.divf %33, %34 : vector<8x64xf32>
    %36 = vector.extract_strided_slice %35 {offsets = [0, 0], sizes = [8, 32], strides = [1, 1]} : vector<8x64xf32> to vector<8x32xf32>
    %37 = vector.extract_strided_slice %35 {offsets = [0, 32], sizes = [8, 32], strides = [1, 1]} : vector<8x64xf32> to vector<8x32xf32>
    %38 = vector.extract_strided_slice %26 {offsets = [0, 64], sizes = [8, 32], strides = [1, 1]} : vector<8x96xf32> to vector<8x32xf32>
    %39 = vector.extract_strided_slice %27 {offsets = [0, 64], sizes = [8, 32], strides = [1, 1]} : vector<8x96xf32> to vector<8x32xf32>
    %40 = vector.broadcast %3 : vector<1x32xf32> to vector<8x32xf32>
    %41 = arith.addf %39, %40 : vector<8x32xf32>
    %42 = arith.mulf %36, %41 : vector<8x32xf32>
    %43 = arith.addf %38, %42 : vector<8x32xf32>
    %44 = math.tanh %43 : vector<8x32xf32>
    %cst_14 = arith.constant 1.000000e+00 : f32
    %45 = vector.broadcast %cst_14 : f32 to vector<8x32xf32>
    %46 = arith.subf %45, %37 : vector<8x32xf32>
    %47 = arith.mulf %46, %44 : vector<8x32xf32>
    %48 = arith.mulf %37, %25 : vector<8x32xf32>
    %49 = arith.addf %47, %48 : vector<8x32xf32>
    %50 = vector.extract_strided_slice %8 {offsets = [16, 0], sizes = [8, 96], strides = [1, 1]} : vector<64x96xf32> to vector<8x96xf32>
    %cst_15 = arith.constant dense<0.000000e+00> : vector<8x96xf32>
    %51 = tpu.matmul %49, %2, %cst_15 {dimension_numbers = #tpu.dot_dimension_numbers<[1], [0], [0], [1], [0, 0, 1, 1], [], []>} : vector<8x32xf32>, vector<32x96xf32>, vector<8x96xf32> -> vector<8x96xf32>
    %52 = vector.extract_strided_slice %50 {offsets = [0, 0], sizes = [8, 64], strides = [1, 1]} : vector<8x96xf32> to vector<8x64xf32>
    %53 = vector.extract_strided_slice %51 {offsets = [0, 0], sizes = [8, 64], strides = [1, 1]} : vector<8x96xf32> to vector<8x64xf32>
    %54 = arith.addf %52, %53 : vector<8x64xf32>
    %55 = arith.negf %54 : vector<8x64xf32>
    %56 = math.exp %55 : vector<8x64xf32>
    %cst_16 = arith.constant 1.000000e+00 : f32
    %57 = vector.broadcast %cst_16 : f32 to vector<8x64xf32>
    %58 = arith.addf %57, %56 : vector<8x64xf32>
    %59 = arith.divf %57, %58 : vector<8x64xf32>
    %60 = vector.extract_strided_slice %59 {offsets = [0, 0], sizes = [8, 32], strides = [1, 1]} : vector<8x64xf32> to vector<8x32xf32>
    %61 = vector.extract_strided_slice %59 {offsets = [0, 32], sizes = [8, 32], strides = [1, 1]} : vector<8x64xf32> to vector<8x32xf32>
    %62 = vector.extract_strided_slice %50 {offsets = [0, 64], sizes = [8, 32], strides = [1, 1]} : vector<8x96xf32> to vector<8x32xf32>
    %63 = vector.extract_strided_slice %51 {offsets = [0, 64], sizes = [8, 32], strides = [1, 1]} : vector<8x96xf32> to vector<8x32xf32>
    %64 = vector.broadcast %3 : vector<1x32xf32> to vector<8x32xf32>
    %65 = arith.addf %63, %64 : vector<8x32xf32>
    %66 = arith.mulf %60, %65 : vector<8x32xf32>
    %67 = arith.addf %62, %66 : vector<8x32xf32>
    %68 = math.tanh %67 : vector<8x32xf32>
    %cst_17 = arith.constant 1.000000e+00 : f32
    %69 = vector.broadcast %cst_17 : f32 to vector<8x32xf32>
    %70 = arith.subf %69, %61 : vector<8x32xf32>
    %71 = arith.mulf %70, %68 : vector<8x32xf32>
    %72 = arith.mulf %61, %49 : vector<8x32xf32>
    %73 = arith.addf %71, %72 : vector<8x32xf32>
    %74 = vector.extract_strided_slice %8 {offsets = [24, 0], sizes = [8, 96], strides = [1, 1]} : vector<64x96xf32> to vector<8x96xf32>
    %cst_18 = arith.constant dense<0.000000e+00> : vector<8x96xf32>
    %75 = tpu.matmul %73, %2, %cst_18 {dimension_numbers = #tpu.dot_dimension_numbers<[1], [0], [0], [1], [0, 0, 1, 1], [], []>} : vector<8x32xf32>, vector<32x96xf32>, vector<8x96xf32> -> vector<8x96xf32>
    %76 = vector.extract_strided_slice %74 {offsets = [0, 0], sizes = [8, 64], strides = [1, 1]} : vector<8x96xf32> to vector<8x64xf32>
    %77 = vector.extract_strided_slice %75 {offsets = [0, 0], sizes = [8, 64], strides = [1, 1]} : vector<8x96xf32> to vector<8x64xf32>
    %78 = arith.addf %76, %77 : vector<8x64xf32>
    %79 = arith.negf %78 : vector<8x64xf32>
    %80 = math.exp %79 : vector<8x64xf32>
    %cst_19 = arith.constant 1.000000e+00 : f32
    %81 = vector.broadcast %cst_19 : f32 to vector<8x64xf32>
    %82 = arith.addf %81, %80 : vector<8x64xf32>
    %83 = arith.divf %81, %82 : vector<8x64xf32>
    %84 = vector.extract_strided_slice %83 {offsets = [0, 0], sizes = [8, 32], strides = [1, 1]} : vector<8x64xf32> to vector<8x32xf32>
    %85 = vector.extract_strided_slice %83 {offsets = [0, 32], sizes = [8, 32], strides = [1, 1]} : vector<8x64xf32> to vector<8x32xf32>
    %86 = vector.extract_strided_slice %74 {offsets = [0, 64], sizes = [8, 32], strides = [1, 1]} : vector<8x96xf32> to vector<8x32xf32>
    %87 = vector.extract_strided_slice %75 {offsets = [0, 64], sizes = [8, 32], strides = [1, 1]} : vector<8x96xf32> to vector<8x32xf32>
    %88 = vector.broadcast %3 : vector<1x32xf32> to vector<8x32xf32>
    %89 = arith.addf %87, %88 : vector<8x32xf32>
    %90 = arith.mulf %84, %89 : vector<8x32xf32>
    %91 = arith.addf %86, %90 : vector<8x32xf32>
    %92 = math.tanh %91 : vector<8x32xf32>
    %cst_20 = arith.constant 1.000000e+00 : f32
    %93 = vector.broadcast %cst_20 : f32 to vector<8x32xf32>
    %94 = arith.subf %93, %85 : vector<8x32xf32>
    %95 = arith.mulf %94, %92 : vector<8x32xf32>
    %96 = arith.mulf %85, %73 : vector<8x32xf32>
    %97 = arith.addf %95, %96 : vector<8x32xf32>
    %98 = vector.extract_strided_slice %8 {offsets = [32, 0], sizes = [8, 96], strides = [1, 1]} : vector<64x96xf32> to vector<8x96xf32>
    %cst_21 = arith.constant dense<0.000000e+00> : vector<8x96xf32>
    %99 = tpu.matmul %97, %2, %cst_21 {dimension_numbers = #tpu.dot_dimension_numbers<[1], [0], [0], [1], [0, 0, 1, 1], [], []>} : vector<8x32xf32>, vector<32x96xf32>, vector<8x96xf32> -> vector<8x96xf32>
    %100 = vector.extract_strided_slice %98 {offsets = [0, 0], sizes = [8, 64], strides = [1, 1]} : vector<8x96xf32> to vector<8x64xf32>
    %101 = vector.extract_strided_slice %99 {offsets = [0, 0], sizes = [8, 64], strides = [1, 1]} : vector<8x96xf32> to vector<8x64xf32>
    %102 = arith.addf %100, %101 : vector<8x64xf32>
    %103 = arith.negf %102 : vector<8x64xf32>
    %104 = math.exp %103 : vector<8x64xf32>
    %cst_22 = arith.constant 1.000000e+00 : f32
    %105 = vector.broadcast %cst_22 : f32 to vector<8x64xf32>
    %106 = arith.addf %105, %104 : vector<8x64xf32>
    %107 = arith.divf %105, %106 : vector<8x64xf32>
    %108 = vector.extract_strided_slice %107 {offsets = [0, 0], sizes = [8, 32], strides = [1, 1]} : vector<8x64xf32> to vector<8x32xf32>
    %109 = vector.extract_strided_slice %107 {offsets = [0, 32], sizes = [8, 32], strides = [1, 1]} : vector<8x64xf32> to vector<8x32xf32>
    %110 = vector.extract_strided_slice %98 {offsets = [0, 64], sizes = [8, 32], strides = [1, 1]} : vector<8x96xf32> to vector<8x32xf32>
    %111 = vector.extract_strided_slice %99 {offsets = [0, 64], sizes = [8, 32], strides = [1, 1]} : vector<8x96xf32> to vector<8x32xf32>
    %112 = vector.broadcast %3 : vector<1x32xf32> to vector<8x32xf32>
    %113 = arith.addf %111, %112 : vector<8x32xf32>
    %114 = arith.mulf %108, %113 : vector<8x32xf32>
    %115 = arith.addf %110, %114 : vector<8x32xf32>
    %116 = math.tanh %115 : vector<8x32xf32>
    %cst_23 = arith.constant 1.000000e+00 : f32
    %117 = vector.broadcast %cst_23 : f32 to vector<8x32xf32>
    %118 = arith.subf %117, %109 : vector<8x32xf32>
    %119 = arith.mulf %118, %116 : vector<8x32xf32>
    %120 = arith.mulf %109, %97 : vector<8x32xf32>
    %121 = arith.addf %119, %120 : vector<8x32xf32>
    %122 = vector.extract_strided_slice %8 {offsets = [40, 0], sizes = [8, 96], strides = [1, 1]} : vector<64x96xf32> to vector<8x96xf32>
    %cst_24 = arith.constant dense<0.000000e+00> : vector<8x96xf32>
    %123 = tpu.matmul %121, %2, %cst_24 {dimension_numbers = #tpu.dot_dimension_numbers<[1], [0], [0], [1], [0, 0, 1, 1], [], []>} : vector<8x32xf32>, vector<32x96xf32>, vector<8x96xf32> -> vector<8x96xf32>
    %124 = vector.extract_strided_slice %122 {offsets = [0, 0], sizes = [8, 64], strides = [1, 1]} : vector<8x96xf32> to vector<8x64xf32>
    %125 = vector.extract_strided_slice %123 {offsets = [0, 0], sizes = [8, 64], strides = [1, 1]} : vector<8x96xf32> to vector<8x64xf32>
    %126 = arith.addf %124, %125 : vector<8x64xf32>
    %127 = arith.negf %126 : vector<8x64xf32>
    %128 = math.exp %127 : vector<8x64xf32>
    %cst_25 = arith.constant 1.000000e+00 : f32
    %129 = vector.broadcast %cst_25 : f32 to vector<8x64xf32>
    %130 = arith.addf %129, %128 : vector<8x64xf32>
    %131 = arith.divf %129, %130 : vector<8x64xf32>
    %132 = vector.extract_strided_slice %131 {offsets = [0, 0], sizes = [8, 32], strides = [1, 1]} : vector<8x64xf32> to vector<8x32xf32>
    %133 = vector.extract_strided_slice %131 {offsets = [0, 32], sizes = [8, 32], strides = [1, 1]} : vector<8x64xf32> to vector<8x32xf32>
    %134 = vector.extract_strided_slice %122 {offsets = [0, 64], sizes = [8, 32], strides = [1, 1]} : vector<8x96xf32> to vector<8x32xf32>
    %135 = vector.extract_strided_slice %123 {offsets = [0, 64], sizes = [8, 32], strides = [1, 1]} : vector<8x96xf32> to vector<8x32xf32>
    %136 = vector.broadcast %3 : vector<1x32xf32> to vector<8x32xf32>
    %137 = arith.addf %135, %136 : vector<8x32xf32>
    %138 = arith.mulf %132, %137 : vector<8x32xf32>
    %139 = arith.addf %134, %138 : vector<8x32xf32>
    %140 = math.tanh %139 : vector<8x32xf32>
    %cst_26 = arith.constant 1.000000e+00 : f32
    %141 = vector.broadcast %cst_26 : f32 to vector<8x32xf32>
    %142 = arith.subf %141, %133 : vector<8x32xf32>
    %143 = arith.mulf %142, %140 : vector<8x32xf32>
    %144 = arith.mulf %133, %121 : vector<8x32xf32>
    %145 = arith.addf %143, %144 : vector<8x32xf32>
    %146 = vector.extract_strided_slice %8 {offsets = [48, 0], sizes = [8, 96], strides = [1, 1]} : vector<64x96xf32> to vector<8x96xf32>
    %cst_27 = arith.constant dense<0.000000e+00> : vector<8x96xf32>
    %147 = tpu.matmul %145, %2, %cst_27 {dimension_numbers = #tpu.dot_dimension_numbers<[1], [0], [0], [1], [0, 0, 1, 1], [], []>} : vector<8x32xf32>, vector<32x96xf32>, vector<8x96xf32> -> vector<8x96xf32>
    %148 = vector.extract_strided_slice %146 {offsets = [0, 0], sizes = [8, 64], strides = [1, 1]} : vector<8x96xf32> to vector<8x64xf32>
    %149 = vector.extract_strided_slice %147 {offsets = [0, 0], sizes = [8, 64], strides = [1, 1]} : vector<8x96xf32> to vector<8x64xf32>
    %150 = arith.addf %148, %149 : vector<8x64xf32>
    %151 = arith.negf %150 : vector<8x64xf32>
    %152 = math.exp %151 : vector<8x64xf32>
    %cst_28 = arith.constant 1.000000e+00 : f32
    %153 = vector.broadcast %cst_28 : f32 to vector<8x64xf32>
    %154 = arith.addf %153, %152 : vector<8x64xf32>
    %155 = arith.divf %153, %154 : vector<8x64xf32>
    %156 = vector.extract_strided_slice %155 {offsets = [0, 0], sizes = [8, 32], strides = [1, 1]} : vector<8x64xf32> to vector<8x32xf32>
    %157 = vector.extract_strided_slice %155 {offsets = [0, 32], sizes = [8, 32], strides = [1, 1]} : vector<8x64xf32> to vector<8x32xf32>
    %158 = vector.extract_strided_slice %146 {offsets = [0, 64], sizes = [8, 32], strides = [1, 1]} : vector<8x96xf32> to vector<8x32xf32>
    %159 = vector.extract_strided_slice %147 {offsets = [0, 64], sizes = [8, 32], strides = [1, 1]} : vector<8x96xf32> to vector<8x32xf32>
    %160 = vector.broadcast %3 : vector<1x32xf32> to vector<8x32xf32>
    %161 = arith.addf %159, %160 : vector<8x32xf32>
    %162 = arith.mulf %156, %161 : vector<8x32xf32>
    %163 = arith.addf %158, %162 : vector<8x32xf32>
    %164 = math.tanh %163 : vector<8x32xf32>
    %cst_29 = arith.constant 1.000000e+00 : f32
    %165 = vector.broadcast %cst_29 : f32 to vector<8x32xf32>
    %166 = arith.subf %165, %157 : vector<8x32xf32>
    %167 = arith.mulf %166, %164 : vector<8x32xf32>
    %168 = arith.mulf %157, %145 : vector<8x32xf32>
    %169 = arith.addf %167, %168 : vector<8x32xf32>
    %170 = vector.extract_strided_slice %8 {offsets = [56, 0], sizes = [8, 96], strides = [1, 1]} : vector<64x96xf32> to vector<8x96xf32>
    %cst_30 = arith.constant dense<0.000000e+00> : vector<8x96xf32>
    %171 = tpu.matmul %169, %2, %cst_30 {dimension_numbers = #tpu.dot_dimension_numbers<[1], [0], [0], [1], [0, 0, 1, 1], [], []>} : vector<8x32xf32>, vector<32x96xf32>, vector<8x96xf32> -> vector<8x96xf32>
    %172 = vector.extract_strided_slice %170 {offsets = [0, 0], sizes = [8, 64], strides = [1, 1]} : vector<8x96xf32> to vector<8x64xf32>
    %173 = vector.extract_strided_slice %171 {offsets = [0, 0], sizes = [8, 64], strides = [1, 1]} : vector<8x96xf32> to vector<8x64xf32>
    %174 = arith.addf %172, %173 : vector<8x64xf32>
    %175 = arith.negf %174 : vector<8x64xf32>
    %176 = math.exp %175 : vector<8x64xf32>
    %cst_31 = arith.constant 1.000000e+00 : f32
    %177 = vector.broadcast %cst_31 : f32 to vector<8x64xf32>
    %178 = arith.addf %177, %176 : vector<8x64xf32>
    %179 = arith.divf %177, %178 : vector<8x64xf32>
    %180 = vector.extract_strided_slice %179 {offsets = [0, 0], sizes = [8, 32], strides = [1, 1]} : vector<8x64xf32> to vector<8x32xf32>
    %181 = vector.extract_strided_slice %179 {offsets = [0, 32], sizes = [8, 32], strides = [1, 1]} : vector<8x64xf32> to vector<8x32xf32>
    %182 = vector.extract_strided_slice %170 {offsets = [0, 64], sizes = [8, 32], strides = [1, 1]} : vector<8x96xf32> to vector<8x32xf32>
    %183 = vector.extract_strided_slice %171 {offsets = [0, 64], sizes = [8, 32], strides = [1, 1]} : vector<8x96xf32> to vector<8x32xf32>
    %184 = vector.broadcast %3 : vector<1x32xf32> to vector<8x32xf32>
    %185 = arith.addf %183, %184 : vector<8x32xf32>
    %186 = arith.mulf %180, %185 : vector<8x32xf32>
    %187 = arith.addf %182, %186 : vector<8x32xf32>
    %188 = math.tanh %187 : vector<8x32xf32>
    %cst_32 = arith.constant 1.000000e+00 : f32
    %189 = vector.broadcast %cst_32 : f32 to vector<8x32xf32>
    %190 = arith.subf %189, %181 : vector<8x32xf32>
    %191 = arith.mulf %190, %188 : vector<8x32xf32>
    %192 = arith.mulf %181, %169 : vector<8x32xf32>
    %193 = arith.addf %191, %192 : vector<8x32xf32>
    %194 = tpu.concatenate %25, %49, %73, %97, %121, %145, %169, %193 in 1 : vector<8x32xf32>, vector<8x32xf32>, vector<8x32xf32>, vector<8x32xf32>, vector<8x32xf32>, vector<8x32xf32>, vector<8x32xf32>, vector<8x32xf32> -> vector<8x256xf32>
    %195 = vector.extract_strided_slice %194 {offsets = [0, 0], sizes = [8, 224], strides = [1, 1]} : vector<8x256xf32> to vector<8x224xf32>
    %c0_33 = arith.constant 0 : index
    %c0_34 = arith.constant 0 : index
    %196 = vector.load %arg6[%c0_33, %c0_34] : memref<32x112xf32, #tpu.memory_space<vmem>>, vector<32x112xf32>
    %cst_35 = arith.constant dense<0.000000e+00> : vector<8x112xf32>
    %197 = tpu.matmul %193, %196, %cst_35 {dimension_numbers = #tpu.dot_dimension_numbers<[1], [0], [0], [1], [0, 0, 1, 1], [], []>} : vector<8x32xf32>, vector<32x112xf32>, vector<8x112xf32> -> vector<8x112xf32>
    %c0_36 = arith.constant 0 : index
    %c0_37 = arith.constant 0 : index
    %198 = vector.load %arg7[%c0_36, %c0_37] : memref<224x112xf32, #tpu.memory_space<vmem>>, vector<224x112xf32>
    %cst_38 = arith.constant dense<0.000000e+00> : vector<8x112xf32>
    %199 = tpu.matmul %195, %198, %cst_38 {dimension_numbers = #tpu.dot_dimension_numbers<[1], [0], [0], [1], [0, 0, 1, 1], [], []>} : vector<8x224xf32>, vector<224x112xf32>, vector<8x112xf32> -> vector<8x112xf32>
    %200 = arith.addf %197, %199 : vector<8x112xf32>
    %201 = math.tanh %200 : vector<8x112xf32>
    %c0_39 = arith.constant 0 : index
    %c0_40 = arith.constant 0 : index
    %202 = vector.load %arg8[%c0_39, %c0_40] : memref<112x7xf32, #tpu.memory_space<vmem>>, vector<112x7xf32>
    %cst_41 = arith.constant dense<0.000000e+00> : vector<8x7xf32>
    %203 = tpu.matmul %201, %202, %cst_41 {dimension_numbers = #tpu.dot_dimension_numbers<[1], [0], [0], [1], [0, 0, 1, 1], [], []>} : vector<8x112xf32>, vector<112x7xf32>, vector<8x7xf32> -> vector<8x7xf32>
    %cst_42 = arith.constant dense<0xFF800000> : vector<8xf32>
    %204 = vector.multi_reduction <maximumf>, %203, %cst_42 [1] : vector<8x7xf32> to vector<8xf32>
    %205 = vector.shape_cast %204 : vector<8xf32> to vector<8x1xf32>
    %206 = vector.broadcast %205 : vector<8x1xf32> to vector<8x7xf32>
    %207 = arith.subf %203, %206 : vector<8x7xf32>
    %208 = math.exp %207 : vector<8x7xf32>
    %cst_43 = arith.constant dense<0.000000e+00> : vector<8xf32>
    %209 = vector.multi_reduction <add>, %208, %cst_43 [1] : vector<8x7xf32> to vector<8xf32>
    %210 = vector.shape_cast %209 : vector<8xf32> to vector<8x1xf32>
    %211 = tpu.reciprocal %210 {approx = true} : vector<8x1xf32> -> vector<8x1xf32>
    %212 = vector.broadcast %211 : vector<8x1xf32> to vector<8x7xf32>
    %213 = arith.mulf %208, %212 : vector<8x7xf32>
    %c0_44 = arith.constant 0 : index
    %c0_45 = arith.constant 0 : index
    %214 = vector.load %arg9[%c0_44, %c0_45] : memref<7x224xf32, #tpu.memory_space<vmem>>, vector<7x224xf32>
    %cst_46 = arith.constant dense<0.000000e+00> : vector<8x224xf32>
    %215 = tpu.matmul %213, %214, %cst_46 {dimension_numbers = #tpu.dot_dimension_numbers<[1], [0], [0], [1], [0, 0, 1, 1], [], []>} : vector<8x7xf32>, vector<7x224xf32>, vector<8x224xf32> -> vector<8x224xf32>
    %216 = arith.mulf %215, %195 : vector<8x224xf32>
    %c0_47 = arith.constant 0 : index
    %c0_48 = arith.constant 0 : index
    %217 = vector.load %arg10[%c0_47, %c0_48] : memref<224x32xf32, #tpu.memory_space<vmem>>, vector<224x32xf32>
    %cst_49 = arith.constant dense<0.000000e+00> : vector<8x32xf32>
    %218 = tpu.matmul %216, %217, %cst_49 {dimension_numbers = #tpu.dot_dimension_numbers<[1], [0], [0], [1], [0, 0, 1, 1], [], []>} : vector<8x224xf32>, vector<224x32xf32>, vector<8x32xf32> -> vector<8x32xf32>
    %c0_50 = arith.constant 0 : index
    %c0_51 = arith.constant 0 : index
    %219 = vector.load %arg11[%c0_50, %c0_51] : memref<32x8xf32, #tpu.memory_space<vmem>>, vector<32x8xf32>
    %cst_52 = arith.constant dense<0.000000e+00> : vector<8x8xf32>
    %220 = tpu.matmul %193, %219, %cst_52 {dimension_numbers = #tpu.dot_dimension_numbers<[1], [0], [0], [1], [0, 0, 1, 1], [], []>} : vector<8x32xf32>, vector<32x8xf32>, vector<8x8xf32> -> vector<8x8xf32>
    %c0_53 = arith.constant 0 : index
    %c0_54 = arith.constant 0 : index
    %221 = vector.load %arg12[%c0_53, %c0_54] : memref<32x8xf32, #tpu.memory_space<vmem>>, vector<32x8xf32>
    %cst_55 = arith.constant dense<0.000000e+00> : vector<8x8xf32>
    %222 = tpu.matmul %218, %221, %cst_55 {dimension_numbers = #tpu.dot_dimension_numbers<[1], [0], [0], [1], [0, 0, 1, 1], [], []>} : vector<8x32xf32>, vector<32x8xf32>, vector<8x8xf32> -> vector<8x8xf32>
    %223 = arith.addf %220, %222 : vector<8x8xf32>
    %c0_56 = arith.constant 0 : index
    %c0_57 = arith.constant 0 : index
    %224 = vector.load %arg13[%c0_56, %c0_57] : memref<1x8xf32, #tpu.memory_space<vmem>>, vector<1x8xf32>
    %225 = vector.broadcast %224 : vector<1x8xf32> to vector<8x8xf32>
    %226 = arith.addf %223, %225 : vector<8x8xf32>
    %227 = arith.negf %226 : vector<8x8xf32>
    %228 = math.exp %227 : vector<8x8xf32>
    %cst_58 = arith.constant 1.000000e+00 : f32
    %229 = vector.broadcast %cst_58 : f32 to vector<8x8xf32>
    %230 = arith.addf %229, %228 : vector<8x8xf32>
    %231 = arith.divf %229, %230 : vector<8x8xf32>
    %c0_59 = arith.constant 0 : index
    %c0_60 = arith.constant 0 : index
    %232 = vector.load %arg16[%c0_59, %c0_60] : memref<8x8xf32, #tpu.memory_space<vmem>>, vector<8x8xf32>
    tpu.vector_store %arg16[%c0_59, %c0_60], %231 {strides = array<i32>} : memref<8x8xf32, #tpu.memory_space<vmem>>, vector<8x8xf32>,
    %c0_61 = arith.constant 0 : index
    %c0_62 = arith.constant 0 : index
    %233 = vector.load %arg14[%c0_61, %c0_62] : memref<256x256xf32, #tpu.memory_space<vmem>>, vector<256x256xf32>
    %cst_63 = arith.constant dense<0.000000e+00> : vector<8x256xf32>
    %234 = tpu.matmul %194, %233, %cst_63 {dimension_numbers = #tpu.dot_dimension_numbers<[1], [0], [0], [1], [0, 0, 1, 1], [], []>} : vector<8x256xf32>, vector<256x256xf32>, vector<8x256xf32> -> vector<8x256xf32>
    %c0_64 = arith.constant 0 : index
    %c0_65 = arith.constant 0 : index
    %235 = vector.load %arg15[%c0_64, %c0_65] : memref<1x256xf32, #tpu.memory_space<vmem>>, vector<1x256xf32>
    %236 = vector.broadcast %235 : vector<1x256xf32> to vector<8x256xf32>
    %237 = arith.addf %234, %236 : vector<8x256xf32>
    %c0_66 = arith.constant 0 : index
    %c0_67 = arith.constant 0 : index
    %238 = vector.load %arg17[%c0_66, %c0_67] : memref<8x256xf32, #tpu.memory_space<vmem>>, vector<8x256xf32>
    tpu.vector_store %arg17[%c0_66, %c0_67], %237 {strides = array<i32>} : memref<8x256xf32, #tpu.memory_space<vmem>>, vector<8x256xf32>,
    return
  }
  func.func @transform_0(%arg0: i32) -> (i32, i32, i32) {
    %c0_i32 = arith.constant 0 : i32
    %c0_i32_0 = arith.constant 0 : i32
    %c0_i32_1 = arith.constant 0 : i32
    return %arg0, %c0_i32, %c0_i32_0 : i32, i32, i32
  }
  func.func @transform_1(%arg0: i32) -> (i32, i32) {
    %c0_i32 = arith.constant 0 : i32
    %c0_i32_0 = arith.constant 0 : i32
    %c0_i32_1 = arith.constant 0 : i32
    return %c0_i32, %c0_i32_0 : i32, i32
  }
  func.func @transform_2(%arg0: i32) -> (i32, i32) {
    %c0_i32 = arith.constant 0 : i32
    %c0_i32_0 = arith.constant 0 : i32
    %c0_i32_1 = arith.constant 0 : i32
    return %c0_i32, %c0_i32_0 : i32, i32
  }
  func.func @transform_3(%arg0: i32) -> (i32, i32) {
    %c0_i32 = arith.constant 0 : i32
    %c0_i32_0 = arith.constant 0 : i32
    %c0_i32_1 = arith.constant 0 : i32
    return %c0_i32, %c0_i32_0 : i32, i32
  }
  func.func @transform_4(%arg0: i32) -> (i32, i32) {
    %c0_i32 = arith.constant 0 : i32
    %c0_i32_0 = arith.constant 0 : i32
    %c0_i32_1 = arith.constant 0 : i32
    return %c0_i32, %c0_i32_0 : i32, i32
  }
  func.func @transform_5(%arg0: i32) -> (i32, i32) {
    %c0_i32 = arith.constant 0 : i32
    %c0_i32_0 = arith.constant 0 : i32
    %c0_i32_1 = arith.constant 0 : i32
    return %c0_i32, %c0_i32_0 : i32, i32
  }
  func.func @transform_6(%arg0: i32) -> (i32, i32) {
    %c0_i32 = arith.constant 0 : i32
    %c0_i32_0 = arith.constant 0 : i32
    %c0_i32_1 = arith.constant 0 : i32
    return %c0_i32, %c0_i32_0 : i32, i32
  }
  func.func @transform_7(%arg0: i32) -> (i32, i32) {
    %c0_i32 = arith.constant 0 : i32
    %c0_i32_0 = arith.constant 0 : i32
    %c0_i32_1 = arith.constant 0 : i32
    return %c0_i32, %c0_i32_0 : i32, i32
  }
  func.func @transform_8(%arg0: i32) -> (i32, i32) {
    %c0_i32 = arith.constant 0 : i32
    %c0_i32_0 = arith.constant 0 : i32
    %c0_i32_1 = arith.constant 0 : i32
    return %c0_i32, %c0_i32_0 : i32, i32
  }
  func.func @transform_9(%arg0: i32) -> (i32, i32) {
    %c0_i32 = arith.constant 0 : i32
    %c0_i32_0 = arith.constant 0 : i32
    %c0_i32_1 = arith.constant 0 : i32
    return %c0_i32, %c0_i32_0 : i32, i32
  }
  func.func @transform_10(%arg0: i32) -> (i32, i32) {
    %c0_i32 = arith.constant 0 : i32
    %c0_i32_0 = arith.constant 0 : i32
    %c0_i32_1 = arith.constant 0 : i32
    return %c0_i32, %c0_i32_0 : i32, i32
  }
  func.func @transform_11(%arg0: i32) -> (i32, i32) {
    %c0_i32 = arith.constant 0 : i32
    %c0_i32_0 = arith.constant 0 : i32
    %c0_i32_1 = arith.constant 0 : i32
    return %c0_i32, %c0_i32_0 : i32, i32
  }
  func.func @transform_12(%arg0: i32) -> (i32, i32) {
    %c0_i32 = arith.constant 0 : i32
    %c0_i32_0 = arith.constant 0 : i32
    %c0_i32_1 = arith.constant 0 : i32
    return %c0_i32, %c0_i32_0 : i32, i32
  }
  func.func @transform_13(%arg0: i32) -> (i32, i32) {
    %c0_i32 = arith.constant 0 : i32
    %c0_i32_0 = arith.constant 0 : i32
    %c0_i32_1 = arith.constant 0 : i32
    return %c0_i32, %c0_i32_0 : i32, i32
  }
  func.func @transform_14(%arg0: i32) -> (i32, i32) {
    %c0_i32 = arith.constant 0 : i32
    %c0_i32_0 = arith.constant 0 : i32
    %c0_i32_1 = arith.constant 0 : i32
    return %c0_i32, %c0_i32_0 : i32, i32
  }
  func.func @transform_15(%arg0: i32) -> (i32, i32) {
    %c0_i32 = arith.constant 0 : i32
    %c0_i32_0 = arith.constant 0 : i32
    return %arg0, %c0_i32 : i32, i32
  }
  func.func @transform_16(%arg0: i32) -> (i32, i32) {
    %c0_i32 = arith.constant 0 : i32
    %c0_i32_0 = arith.constant 0 : i32
    return %arg0, %c0_i32 : i32, i32
  }
}

</mosaic_0001>

<llo_original>
// kernel: tpu_custom_call.1
$region0: #{tpu_custom_call.1}
  #allocation0 [shape = 'u32[]', space=smem, size = 0x4, offset = 0x4, fixed_abs, tag = 'smem constant byte address 0x4 - core index']
  #allocation1 [shape = 'u32[144,128]{1,0:T(1,128)}', space=vmem, size = 0x12000, scoped, tag = 'internal scratch']
  %s0 = inlined_call_operand.vmem [shape: f32[1,64,8], index: 0, kind: input, shape index: {}]
  %s1 = inlined_call_operand.vmem [shape: f32[8,96], index: 1, kind: input, shape index: {}]
  %s2 = inlined_call_operand.vmem [shape: f32[32,96], index: 2, kind: input, shape index: {}]
  %s3 = inlined_call_operand.vmem [shape: f32[1,96], index: 3, kind: input, shape index: {}]
  %s4 = inlined_call_operand.vmem [shape: f32[1,32], index: 4, kind: input, shape index: {}]
  %s5 = inlined_call_operand.vmem [shape: f32[32,112], index: 5, kind: input, shape index: {}]
  %s6 = inlined_call_operand.hbm [shape: f32[224,112], index: 6, kind: input, shape index: {}]
  %s7 = inlined_call_operand.vmem [shape: f32[112,7], index: 7, kind: input, shape index: {}]
  %s8 = inlined_call_operand.vmem [shape: f32[7,224], index: 8, kind: input, shape index: {}]
  %s9 = inlined_call_operand.vmem [shape: f32[224,32], index: 9, kind: input, shape index: {}]
  %s10 = inlined_call_operand.vmem [shape: f32[32,8], index: 10, kind: input, shape index: {}]
  %s11 = inlined_call_operand.vmem [shape: f32[32,8], index: 11, kind: input, shape index: {}]
  %s12 = inlined_call_operand.vmem [shape: f32[1,8], index: 12, kind: input, shape index: {}]
  %s13 = inlined_call_operand.vmem [shape: f32[256,256], index: 13, kind: input, shape index: {}]
  %s14 = inlined_call_operand.vmem [shape: f32[1,256], index: 14, kind: input, shape index: {}]
  %s15 = inlined_call_operand.hbm [shape: f32[8,8], index: 15, kind: output, shape index: {0}]
  %s16 = inlined_call_operand.hbm [shape: f32[8,256], index: 16, kind: output, shape index: {1}]
  %17 = xla_tuple %s15, %s16
  %s18 = sld [smem:[#allocation0]]
  $region82: #{tpu_custom_call.1} parent=0
    _
  %s20 = ssub.s32 1, %s18
  %s21 = scalar_select 0, %s20, %s18
  $region1: #{tpu_custom_call.1} parent=0
    #allocation2 [shape = 'u8[114688]{0}', space=vmem, size = 0x1c000, scoped, tag = 'input window, operand 6, single buffered']
    #allocation3 [shape = 's32[1]{0}', space=sflag, size = 0x4, scoped, tag = 'scoped memory for tpu_custom_call.1']
    #allocation4 [shape = 's32[1]{0}', space=sflag, size = 0x4, scoped, tag = 'scoped memory for tpu_custom_call.1']
    #allocation5 [shape = 'u8[4096]{0}', space=vmem, size = 0x1000, scoped, tag = 'output window, operand 0, single buffered']
    #allocation6 [shape = 'u8[8192]{0}', space=vmem, size = 0x2000, scoped, tag = 'output window, operand 1, single buffered']
    #allocation7 [shape = 's32[1]{0}', space=sflag, size = 0x4, scoped, tag = 'scoped memory for tpu_custom_call.1']
    %22 = vsyncpa [#allocation3], 0
    %23 = vsyncpa [#allocation4], 0
    %24 = vsyncpa [#allocation7], 0
    // Predicated region
    $region2: #{tpu_custom_call.1} parent=1 // pred_check
      _
    $region3: #{tpu_custom_call.1} parent=1 // pred_check_branch
      %26 = sbr.rel (0) target = $region5
    $region4: #{tpu_custom_call.1} parent=1 // pred_region
      _
    $region5: #{tpu_custom_call.1} parent=1 // pred_fallthru
      _
    // Predicated region
    $region6: #{tpu_custom_call.1} parent=1 // pred_check
      _
    $region7: #{tpu_custom_call.1} parent=1 // pred_check_branch
      %28 = sbr.rel (0) target = $region9
    $region8: #{tpu_custom_call.1} parent=1 // pred_region
      _
    $region9: #{tpu_custom_call.1} parent=1 // pred_fallthru
      _
    // Predicated region
    $region10: #{tpu_custom_call.1} parent=1 // pred_check
      _
    $region11: #{tpu_custom_call.1} parent=1 // pred_check_branch
      %30 = sbr.rel (0) target = $region13
    $region12: #{tpu_custom_call.1} parent=1 // pred_region
      _
    $region13: #{tpu_custom_call.1} parent=1 // pred_fallthru
      _
    // Predicated region
    $region14: #{tpu_custom_call.1} parent=1 // pred_check
      _
    $region15: #{tpu_custom_call.1} parent=1 // pred_check_branch
      %32 = sbr.rel (0) target = $region17
    $region16: #{tpu_custom_call.1} parent=1 // pred_region
      _
    $region17: #{tpu_custom_call.1} parent=1 // pred_fallthru
      _
    // Predicated region
    $region18: #{tpu_custom_call.1} parent=1 // pred_check
      _
    $region19: #{tpu_custom_call.1} parent=1 // pred_check_branch
      %34 = sbr.rel (0) target = $region21
    $region20: #{tpu_custom_call.1} parent=1 // pred_region
      _
    $region21: #{tpu_custom_call.1} parent=1 // pred_fallthru
      _
    // Predicated region
    $region22: #{tpu_custom_call.1} parent=1 // pred_check
      _
    $region23: #{tpu_custom_call.1} parent=1 // pred_check_branch
      %36 = sbr.rel (0) target = $region25
    $region24: #{tpu_custom_call.1} parent=1 // pred_region
      _
    $region25: #{tpu_custom_call.1} parent=1 // pred_fallthru
      _
    // Predicated region
    $region26: #{tpu_custom_call.1} parent=1 // pred_check
      _
    $region27: #{tpu_custom_call.1} parent=1 // pred_check_branch
      %38 = sbr.rel (0) target = $region29
    $region28: #{tpu_custom_call.1} parent=1 // pred_region
      %s40 = ssub.s32 3584, 3584
      %41 = vsyncadd [#allocation3], %s40
      %s42 = sshll.u32 [#allocation2], 4
      %s43 = int_to_ptr.vmem [resolvable:$true] %s42
      %48 = dma.hbm_to_vmem [thread:$0]  %s6, 3584, %s43, [#allocation3], 128, 128, 8
    $region29: #{tpu_custom_call.1} parent=1 // pred_fallthru
      _
    // Predicated region
    $region30: #{tpu_custom_call.1} parent=1 // pred_check
      _
    $region31: #{tpu_custom_call.1} parent=1 // pred_check_branch
      %50 = sbr.rel (0) target = $region33
    $region32: #{tpu_custom_call.1} parent=1 // pred_region
      _
    $region33: #{tpu_custom_call.1} parent=1 // pred_fallthru
      _
    // Predicated region
    $region34: #{tpu_custom_call.1} parent=1 // pred_check
      _
    $region35: #{tpu_custom_call.1} parent=1 // pred_check_branch
      %52 = sbr.rel (0) target = $region37
    $region36: #{tpu_custom_call.1} parent=1 // pred_region
      _
    $region37: #{tpu_custom_call.1} parent=1 // pred_fallthru
      _
    // Predicated region
    $region38: #{tpu_custom_call.1} parent=1 // pred_check
      _
    $region39: #{tpu_custom_call.1} parent=1 // pred_check_branch
      %54 = sbr.rel (0) target = $region41
    $region40: #{tpu_custom_call.1} parent=1 // pred_region
      _
    $region41: #{tpu_custom_call.1} parent=1 // pred_fallthru
      _
    // Predicated region
    $region42: #{tpu_custom_call.1} parent=1 // pred_check
      _
    $region43: #{tpu_custom_call.1} parent=1 // pred_check_branch
      %56 = sbr.rel (0) target = $region45
    $region44: #{tpu_custom_call.1} parent=1 // pred_region
      _
    $region45: #{tpu_custom_call.1} parent=1 // pred_fallthru
      _
    // Predicated region
    $region46: #{tpu_custom_call.1} parent=1 // pred_check
      _
    $region47: #{tpu_custom_call.1} parent=1 // pred_check_branch
      %58 = sbr.rel (0) target = $region49
    $region48: #{tpu_custom_call.1} parent=1 // pred_region
      _
    $region49: #{tpu_custom_call.1} parent=1 // pred_fallthru
      _
    // Predicated region
    $region50: #{tpu_custom_call.1} parent=1 // pred_check
      _
    $region51: #{tpu_custom_call.1} parent=1 // pred_check_branch
      %60 = sbr.rel (0) target = $region53
    $region52: #{tpu_custom_call.1} parent=1 // pred_region
      _
    $region53: #{tpu_custom_call.1} parent=1 // pred_fallthru
      _
    // Predicated region
    $region54: #{tpu_custom_call.1} parent=1 // pred_check
      _
    $region55: #{tpu_custom_call.1} parent=1 // pred_check_branch
      %62 = sbr.rel (0) target = $region57
    $region56: #{tpu_custom_call.1} parent=1 // pred_region
      _
    $region57: #{tpu_custom_call.1} parent=1 // pred_fallthru
      _
    // Predicated region
    $region58: #{tpu_custom_call.1} parent=1 // pred_check
      _
    $region59: #{tpu_custom_call.1} parent=1 // pred_check_branch
      %64 = sbr.rel (0) target = $region61
    $region60: #{tpu_custom_call.1} parent=1 // pred_region
      _
    $region61: #{tpu_custom_call.1} parent=1 // pred_fallthru
      _
    // Predicated region
    $region62: #{tpu_custom_call.1} parent=1 // pred_check
      _
    $region63: #{tpu_custom_call.1} parent=1 // pred_check_branch
      %66 = sbr.rel (0) target = $region65
    $region64: #{tpu_custom_call.1} parent=1 // pred_region
      %67 = dma.done [#allocation3], 3584
    $region65: #{tpu_custom_call.1} parent=1 // pred_fallthru
      _
    %v68 = vld [vmem:[%s0] sm:$0xff]
    %v69 = vld [vmem:[%s0 + $0x8] sm:$0xff]
    %v70 = vld [vmem:[%s0 + $0x10] sm:$0xff]
    %v71 = vld [vmem:[%s0 + $0x18] sm:$0xff]
    %v72 = vld [vmem:[%s0 + $0x20] sm:$0xff]
    %v73 = vld [vmem:[%s0 + $0x28] sm:$0xff]
    %v74 = vld [vmem:[%s0 + $0x30] sm:$0xff]
    %v75 = vld [vmem:[%s0 + $0x38] sm:$0xff]
    %v76 = vld [vmem:[%s2] sm:$0xff]
    %v77 = vld [vmem:[%s2 + $0x8] sm:$0xff]
    %v78 = vld [vmem:[%s2 + $0x10] sm:$0xff]
    %v79 = vld [vmem:[%s2 + $0x18] sm:$0xff]
    %v80 = vld [vmem:[%s4] sm:$0x1]
    %v81 = vld [vmem:[%s1] sm:$0xff]
    %v82 = vld [vmem:[%s3] sm:$0x1]
    %v84 = vlaneseq
    %v85 = vshrl.u32 %v84, 7
    %v86 = vsub.s32 0, %v85
    %v87 = vrot.slane %v82, %v86
    %vm89 = vcmask 64512
    %v91 = vsel %vm89, %v68, 0
    %v94 = vsel %vm89, %v69, 0
    %v97 = vsel %vm89, %v70, 0
    %v100 = vsel %vm89, %v71, 0
    %v103 = vsel %vm89, %v72, 0
    %v106 = vsel %vm89, %v73, 0
    %v109 = vsel %vm89, %v74, 0
    %v112 = vsel %vm89, %v75, 0
    %114 = vmatprep.subr.mxu0 0.0
    %115 = vmatpush1.msra.mxu0 %v81
    %116 = vmatprep.subr.mxu0 0.0
    %117 = vmatpush1.msra.mxu0 0.0
    %118 = vmatprep.subr.mxu0 0.0
    %119 = vmatpush1.msra.mxu0 0.0
    %120 = vmatprep.subr.mxu0 0.0
    %121 = vmatpush1.msra.mxu0 0.0
    %122 = vmatprep.subr.mxu0 0.0
    %123 = vmatpush1.msra.mxu0 0.0
    %124 = vmatprep.subr.mxu0 0.0
    %125 = vmatpush1.msra.mxu0 0.0
    %126 = vmatprep.subr.mxu0 0.0
    %127 = vmatpush1.msra.mxu0 0.0
    %128 = vmatprep.subr.mxu0 0.0
    %129 = vmatpush1.msra.mxu0 0.0
    %130 = vmatprep.subr.mxu0 0.0
    %131 = vmatpush1.msra.mxu0 0.0
    %132 = vmatprep.subr.mxu0 0.0
    %133 = vmatpush1.msra.mxu0 0.0
    %134 = vmatprep.subr.mxu0 0.0
    %135 = vmatpush1.msra.mxu0 0.0
    %136 = vmatprep.subr.mxu0 0.0
    %137 = vmatpush1.msra.mxu0 0.0
    %138 = vmatprep.subr.mxu0 0.0
    %139 = vmatpush1.msra.mxu0 0.0
    %140 = vmatprep.subr.mxu0 0.0
    %141 = vmatpush1.msra.mxu0 0.0
    %142 = vmatprep.subr.mxu0 0.0
    %143 = vmatpush1.msra.mxu0 0.0
    %144 = vmatprep.subr.mxu0 0.0
    %145 = vmatpush1.msra.mxu0 0.0
    %146 = vmatprep.subr.mxu0 0.0
    %147 = vmatpush1.msra.mxu0 0.0
    %148 = vmatprep.subr.mxu0 0.0
    %149 = vmatpush1.msra.mxu0 0.0
    %150 = vmatprep.subr.mxu0 0.0
    %151 = vmatpush1.msra.mxu0 0.0
    %152 = vmatprep.subr.mxu0 0.0
    %153 = vmatpush1.msra.mxu0 0.0
    %154 = vmatprep.subr.mxu0 0.0
    %155 = vmatpush1.msra.mxu0 0.0
    %156 = vmatprep.subr.mxu0 0.0
    %157 = vmatpush1.msra.mxu0 0.0
    %158 = vmatprep.subr.mxu0 0.0
    %159 = vmatpush1.msra.mxu0 0.0
    %160 = vmatprep.subr.mxu0 0.0
    %161 = vmatpush1.msra.mxu0 0.0
    %162 = vmatprep.subr.mxu0 0.0
    %163 = vmatpush1.msra.mxu0 0.0
    %164 = vmatprep.subr.mxu0 0.0
    %165 = vmatpush1.msra.mxu0 0.0
    %166 = vmatprep.subr.mxu0 0.0
    %167 = vmatpush1.msra.mxu0 0.0
    %168 = vmatprep.subr.mxu0 0.0
    %169 = vmatpush1.msra.mxu0 0.0
    %170 = vmatprep.subr.mxu0 0.0
    %171 = vmatpush1.msra.mxu0 0.0
    %172 = vmatprep.subr.mxu0 0.0
    %173 = vmatpush1.msra.mxu0 0.0
    %174 = vmatprep.subr.mxu0 0.0
    %175 = vmatpush1.msra.mxu0 0.0
    %176 = vmatprep.subr.mxu0 0.0
    %177 = vmatpush1.msra.mxu0 0.0
    %178 = vmatprep.mubr.f32.mxu0 0.0
    %179 = vmatmul.mubr.f32.gmra.mrb[0].mxu0 %v91
    %v180 = vpop.f32.mrb[0].mxu0
    %v181 = vadd.f32 %v87, %v180
    %v182 = vpop.f32.mrb[0].mxu0
    %183 = vmatprep.mubr.f32.mxu0 0.0
    %184 = vmatmul.mubr.f32.gmra.mrb[0].mxu0 %v94
    %v185 = vpop.f32.mrb[0].mxu0
    %v186 = vadd.f32 %v87, %v185
    %v187 = vpop.f32.mrb[0].mxu0
    %188 = vmatprep.mubr.f32.mxu0 0.0
    %189 = vmatmul.mubr.f32.gmra.mrb[0].mxu0 %v97
    %v190 = vpop.f32.mrb[0].mxu0
    %v191 = vadd.f32 %v87, %v190
    %v192 = vpop.f32.mrb[0].mxu0
    %193 = vmatprep.mubr.f32.mxu0 0.0
    %194 = vmatmul.mubr.f32.gmra.mrb[0].mxu0 %v100
    %v195 = vpop.f32.mrb[0].mxu0
    %v196 = vadd.f32 %v87, %v195
    %v197 = vpop.f32.mrb[0].mxu0
    %198 = vmatprep.mubr.f32.mxu0 0.0
    %199 = vmatmul.mubr.f32.gmra.mrb[0].mxu0 %v103
    %v200 = vpop.f32.mrb[0].mxu0
    %v201 = vadd.f32 %v87, %v200
    %v202 = vpop.f32.mrb[0].mxu0
    %203 = vmatprep.mubr.f32.mxu0 0.0
    %204 = vmatmul.mubr.f32.gmra.mrb[0].mxu0 %v106
    %v205 = vpop.f32.mrb[0].mxu0
    %v206 = vadd.f32 %v87, %v205
    %v207 = vpop.f32.mrb[0].mxu0
    %208 = vmatprep.mubr.f32.mxu0 0.0
    %209 = vmatmul.mubr.f32.gmra.mrb[0].mxu0 %v109
    %v210 = vpop.f32.mrb[0].mxu0
    %v211 = vadd.f32 %v87, %v210
    %v212 = vpop.f32.mrb[0].mxu0
    %213 = vmatprep.mubr.f32.mxu0 0.0
    %214 = vmatmul.mubr.f32.gmra.mrb[0].mxu0 %v112
    %v215 = vpop.f32.mrb[0].mxu0
    %v216 = vadd.f32 %v87, %v215
    %v217 = vpop.f32.mrb[0].mxu0
    %218 = vdwg.mxu0
    %v219 = vxor.u32 %v181, 2147483648
    %v220 = vmul.f32 %v219, 1.442695
    %v221 = vpow.pop %v220
    %v222 = vadd.f32 %v221, 1.0
    %v223 = vrcp.pop %v222
    %v224 = vmul.f32 1.0, %v223
    %v225 = vsub.f32 1.0, %v224
    %v227 = vlaneseq
    %v228 = vshrl.u32 %v227, 7
    %v229 = vsub.s32 0, %v228
    %v230 = vrot.slane %v80, %v229
    %v232 = vmul.f32 %v224, %v230
    %234 = vrot.lane.b32.xlu0 %v232, 64
    %v235 = vpop.permute.xlu0 %234
    %v237 = vadd.f32 %v181, %v235
    %v238 = vtanh.pop %v237
    %240 = vrot.lane.b32.xlu0 %v238, 96
    %v241 = vpop.permute.xlu0 %240
    %v243 = vmul.f32 %v225, %v241
    %245 = vrot.lane.b32.xlu0 %v243, 96
    %v246 = vpop.permute.xlu0 %245
    %vm247 = vcmask 261120
    %v248 = vsel %vm247, %v246, 0
    %250 = vmatprep.subr.mxu0 0.0
    %251 = vmatpush1.msra.mxu0 %v76
    %252 = vmatprep.subr.mxu0 0.0
    %253 = vmatpush1.msra.mxu0 %v77
    %254 = vmatprep.subr.mxu0 0.0
    %255 = vmatpush1.msra.mxu0 %v78
    %256 = vmatprep.subr.mxu0 0.0
    %257 = vmatpush1.msra.mxu0 %v79
    %258 = vmatprep.subr.mxu0 0.0
    %259 = vmatpush1.msra.mxu0 0.0
    %260 = vmatprep.subr.mxu0 0.0
    %261 = vmatpush1.msra.mxu0 0.0
    %262 = vmatprep.subr.mxu0 0.0
    %263 = vmatpush1.msra.mxu0 0.0
    %264 = vmatprep.subr.mxu0 0.0
    %265 = vmatpush1.msra.mxu0 0.0
    %266 = vmatprep.subr.mxu0 0.0
    %267 = vmatpush1.msra.mxu0 0.0
    %268 = vmatprep.subr.mxu0 0.0
    %269 = vmatpush1.msra.mxu0 0.0
    %270 = vmatprep.subr.mxu0 0.0
    %271 = vmatpush1.msra.mxu0 0.0
    %272 = vmatprep.subr.mxu0 0.0
    %273 = vmatpush1.msra.mxu0 0.0
    %274 = vmatprep.subr.mxu0 0.0
    %275 = vmatpush1.msra.mxu0 0.0
    %276 = vmatprep.subr.mxu0 0.0
    %277 = vmatpush1.msra.mxu0 0.0
    %278 = vmatprep.subr.mxu0 0.0
    %279 = vmatpush1.msra.mxu0 0.0
    %280 = vmatprep.subr.mxu0 0.0
    %281 = vmatpush1.msra.mxu0 0.0
    %282 = vmatprep.subr.mxu0 0.0
    %283 = vmatpush1.msra.mxu0 0.0
    %284 = vmatprep.subr.mxu0 0.0
    %285 = vmatpush1.msra.mxu0 0.0
    %286 = vmatprep.subr.mxu0 0.0
    %287 = vmatpush1.msra.mxu0 0.0
    %288 = vmatprep.subr.mxu0 0.0
    %289 = vmatpush1.msra.mxu0 0.0
    %290 = vmatprep.subr.mxu0 0.0
    %291 = vmatpush1.msra.mxu0 0.0
    %292 = vmatprep.subr.mxu0 0.0
    %293 = vmatpush1.msra.mxu0 0.0
    %294 = vmatprep.subr.mxu0 0.0
    %295 = vmatpush1.msra.mxu0 0.0
    %296 = vmatprep.subr.mxu0 0.0
    %297 = vmatpush1.msra.mxu0 0.0
    %298 = vmatprep.subr.mxu0 0.0
    %299 = vmatpush1.msra.mxu0 0.0
    %300 = vmatprep.subr.mxu0 0.0
    %301 = vmatpush1.msra.mxu0 0.0
    %302 = vmatprep.subr.mxu0 0.0
    %303 = vmatpush1.msra.mxu0 0.0
    %304 = vmatprep.subr.mxu0 0.0
    %305 = vmatpush1.msra.mxu0 0.0
    %306 = vmatprep.subr.mxu0 0.0
    %307 = vmatpush1.msra.mxu0 0.0
    %308 = vmatprep.subr.mxu0 0.0
    %309 = vmatpush1.msra.mxu0 0.0
    %310 = vmatprep.subr.mxu0 0.0
    %311 = vmatpush1.msra.mxu0 0.0
    %312 = vmatprep.subr.mxu0 0.0
    %313 = vmatpush1.msra.mxu0 0.0
    %314 = vmatprep.mubr.f32.mxu0 0.0
    %315 = vmatmul.mubr.f32.gmra.mrb[0].mxu0 %v248
    %v316 = vpop.f32.mrb[0].mxu0
    %v317 = vadd.f32 0.0, %v316
    %v318 = vpop.f32.mrb[0].mxu0
    %319 = vdwg.mxu0
    %v320 = vadd.f32 %v186, %v317
    %v321 = vxor.u32 %v320, 2147483648
    %v322 = vmul.f32 %v321, 1.442695
    %v323 = vpow.pop %v322
    %v324 = vadd.f32 %v323, 1.0
    %v325 = vrcp.pop %v324
    %v326 = vmul.f32 1.0, %v325
    %327 = vrot.lane.b32.xlu0 %v230, 64
    %v328 = vpop.permute.xlu0 %327
    %v330 = vadd.f32 %v317, %v328
    %332 = vrot.lane.b32.xlu0 %v330, 64
    %v333 = vpop.permute.xlu0 %332
    %v335 = vmul.f32 %v326, %v333
    %337 = vrot.lane.b32.xlu0 %v335, 64
    %v338 = vpop.permute.xlu0 %337
    %v340 = vadd.f32 %v186, %v338
    %v341 = vtanh.pop %v340
    %v342 = vsub.f32 1.0, %v326
    %344 = vrot.lane.b32.xlu0 %v341, 96
    %v345 = vpop.permute.xlu0 %344
    %v347 = vmul.f32 %v342, %v345
    %v348 = vmul.f32 %v326, %v243
    %v349 = vadd.f32 %v347, %v348
    %351 = vrot.lane.b32.xlu0 %v349, 96
    %v352 = vpop.permute.xlu0 %351
    %v353 = vsel %vm247, %v352, 0
    %355 = vmatprep.subr.mxu0 0.0
    %356 = vmatpush1.msra.mxu0 %v76
    %357 = vmatprep.subr.mxu0 0.0
    %358 = vmatpush1.msra.mxu0 %v77
    %359 = vmatprep.subr.mxu0 0.0
    %360 = vmatpush1.msra.mxu0 %v78
    %361 = vmatprep.subr.mxu0 0.0
    %362 = vmatpush1.msra.mxu0 %v79
    %363 = vmatprep.subr.mxu0 0.0
    %364 = vmatpush1.msra.mxu0 0.0
    %365 = vmatprep.subr.mxu0 0.0
    %366 = vmatpush1.msra.mxu0 0.0
    %367 = vmatprep.subr.mxu0 0.0
    %368 = vmatpush1.msra.mxu0 0.0
    %369 = vmatprep.subr.mxu0 0.0
    %370 = vmatpush1.msra.mxu0 0.0
    %371 = vmatprep.subr.mxu0 0.0
    %372 = vmatpush1.msra.mxu0 0.0
    %373 = vmatprep.subr.mxu0 0.0
    %374 = vmatpush1.msra.mxu0 0.0
    %375 = vmatprep.subr.mxu0 0.0
    %376 = vmatpush1.msra.mxu0 0.0
    %377 = vmatprep.subr.mxu0 0.0
    %378 = vmatpush1.msra.mxu0 0.0
    %379 = vmatprep.subr.mxu0 0.0
    %380 = vmatpush1.msra.mxu0 0.0
    %381 = vmatprep.subr.mxu0 0.0
    %382 = vmatpush1.msra.mxu0 0.0
    %383 = vmatprep.subr.mxu0 0.0
    %384 = vmatpush1.msra.mxu0 0.0
    %385 = vmatprep.subr.mxu0 0.0
    %386 = vmatpush1.msra.mxu0 0.0
    %387 = vmatprep.subr.mxu0 0.0
    %388 = vmatpush1.msra.mxu0 0.0
    %389 = vmatprep.subr.mxu0 0.0
    %390 = vmatpush1.msra.mxu0 0.0
    %391 = vmatprep.subr.mxu0 0.0
    %392 = vmatpush1.msra.mxu0 0.0
    %393 = vmatprep.subr.mxu0 0.0
    %394 = vmatpush1.msra.mxu0 0.0
    %395 = vmatprep.subr.mxu0 0.0
    %396 = vmatpush1.msra.mxu0 0.0
    %397 = vmatprep.subr.mxu0 0.0
    %398 = vmatpush1.msra.mxu0 0.0
    %399 = vmatprep.subr.mxu0 0.0
    %400 = vmatpush1.msra.mxu0 0.0
    %401 = vmatprep.subr.mxu0 0.0
    %402 = vmatpush1.msra.mxu0 0.0
    %403 = vmatprep.subr.mxu0 0.0
    %404 = vmatpush1.msra.mxu0 0.0
    %405 = vmatprep.subr.mxu0 0.0
    %406 = vmatpush1.msra.mxu0 0.0
    %407 = vmatprep.subr.mxu0 0.0
    %408 = vmatpush1.msra.mxu0 0.0
    %409 = vmatprep.subr.mxu0 0.0
    %410 = vmatpush1.msra.mxu0 0.0
    %411 = vmatprep.subr.mxu0 0.0
    %412 = vmatpush1.msra.mxu0 0.0
    %413 = vmatprep.subr.mxu0 0.0
    %414 = vmatpush1.msra.mxu0 0.0
    %415 = vmatprep.subr.mxu0 0.0
    %416 = vmatpush1.msra.mxu0 0.0
    %417 = vmatprep.subr.mxu0 0.0
    %418 = vmatpush1.msra.mxu0 0.0
    %419 = vmatprep.mubr.f32.mxu0 0.0
    %420 = vmatmul.mubr.f32.gmra.mrb[0].mxu0 %v353
    %v421 = vpop.f32.mrb[0].mxu0
    %v422 = vadd.f32 0.0, %v421
    %v423 = vpop.f32.mrb[0].mxu0
    %424 = vdwg.mxu0
    %v425 = vadd.f32 %v191, %v422
    %v426 = vxor.u32 %v425, 2147483648
    %v427 = vmul.f32 %v426, 1.442695
    %v428 = vpow.pop %v427
    %v429 = vadd.f32 %v428, 1.0
    %v430 = vrcp.pop %v429
    %v431 = vmul.f32 1.0, %v430
    %v432 = vadd.f32 %v422, %v328
    %434 = vrot.lane.b32.xlu0 %v432, 64
    %v435 = vpop.permute.xlu0 %434
    %v437 = vmul.f32 %v431, %v435
    %439 = vrot.lane.b32.xlu0 %v437, 64
    %v440 = vpop.permute.xlu0 %439
    %v442 = vadd.f32 %v191, %v440
    %v443 = vtanh.pop %v442
    %v444 = vsub.f32 1.0, %v431
    %446 = vrot.lane.b32.xlu0 %v443, 96
    %v447 = vpop.permute.xlu0 %446
    %v449 = vmul.f32 %v444, %v447
    %v450 = vmul.f32 %v431, %v349
    %v451 = vadd.f32 %v449, %v450
    %453 = vrot.lane.b32.xlu0 %v451, 96
    %v454 = vpop.permute.xlu0 %453
    %v455 = vsel %vm247, %v454, 0
    %457 = vmatprep.subr.mxu0 0.0
    %458 = vmatpush1.msra.mxu0 %v76
    %459 = vmatprep.subr.mxu0 0.0
    %460 = vmatpush1.msra.mxu0 %v77
    %461 = vmatprep.subr.mxu0 0.0
    %462 = vmatpush1.msra.mxu0 %v78
    %463 = vmatprep.subr.mxu0 0.0
    %464 = vmatpush1.msra.mxu0 %v79
    %465 = vmatprep.subr.mxu0 0.0
    %466 = vmatpush1.msra.mxu0 0.0
    %467 = vmatprep.subr.mxu0 0.0
    %468 = vmatpush1.msra.mxu0 0.0
    %469 = vmatprep.subr.mxu0 0.0
    %470 = vmatpush1.msra.mxu0 0.0
    %471 = vmatprep.subr.mxu0 0.0
    %472 = vmatpush1.msra.mxu0 0.0
    %473 = vmatprep.subr.mxu0 0.0
    %474 = vmatpush1.msra.mxu0 0.0
    %475 = vmatprep.subr.mxu0 0.0
    %476 = vmatpush1.msra.mxu0 0.0
    %477 = vmatprep.subr.mxu0 0.0
    %478 = vmatpush1.msra.mxu0 0.0
    %479 = vmatprep.subr.mxu0 0.0
    %480 = vmatpush1.msra.mxu0 0.0
    %481 = vmatprep.subr.mxu0 0.0
    %482 = vmatpush1.msra.mxu0 0.0
    %483 = vmatprep.subr.mxu0 0.0
    %484 = vmatpush1.msra.mxu0 0.0
    %485 = vmatprep.subr.mxu0 0.0
    %486 = vmatpush1.msra.mxu0 0.0
    %487 = vmatprep.subr.mxu0 0.0
    %488 = vmatpush1.msra.mxu0 0.0
    %489 = vmatprep.subr.mxu0 0.0
    %490 = vmatpush1.msra.mxu0 0.0
    %491 = vmatprep.subr.mxu0 0.0
    %492 = vmatpush1.msra.mxu0 0.0
    %493 = vmatprep.subr.mxu0 0.0
    %494 = vmatpush1.msra.mxu0 0.0
    %495 = vmatprep.subr.mxu0 0.0
    %496 = vmatpush1.msra.mxu0 0.0
    %497 = vmatprep.subr.mxu0 0.0
    %498 = vmatpush1.msra.mxu0 0.0
    %499 = vmatprep.subr.mxu0 0.0
    %500 = vmatpush1.msra.mxu0 0.0
    %501 = vmatprep.subr.mxu0 0.0
    %502 = vmatpush1.msra.mxu0 0.0
    %503 = vmatprep.subr.mxu0 0.0
    %504 = vmatpush1.msra.mxu0 0.0
    %505 = vmatprep.subr.mxu0 0.0
    %506 = vmatpush1.msra.mxu0 0.0
    %507 = vmatprep.subr.mxu0 0.0
    %508 = vmatpush1.msra.mxu0 0.0
    %509 = vmatprep.subr.mxu0 0.0
    %510 = vmatpush1.msra.mxu0 0.0
    %511 = vmatprep.subr.mxu0 0.0
    %512 = vmatpush1.msra.mxu0 0.0
    %513 = vmatprep.subr.mxu0 0.0
    %514 = vmatpush1.msra.mxu0 0.0
    %515 = vmatprep.subr.mxu0 0.0
    %516 = vmatpush1.msra.mxu0 0.0
    %517 = vmatprep.subr.mxu0 0.0
    %518 = vmatpush1.msra.mxu0 0.0
    %519 = vmatprep.subr.mxu0 0.0
    %520 = vmatpush1.msra.mxu0 0.0
    %521 = vmatprep.mubr.f32.mxu0 0.0
    %522 = vmatmul.mubr.f32.gmra.mrb[0].mxu0 %v455
    %v523 = vpop.f32.mrb[0].mxu0
    %v524 = vadd.f32 0.0, %v523
    %v525 = vpop.f32.mrb[0].mxu0
    %526 = vdwg.mxu0
    %v527 = vadd.f32 %v196, %v524
    %v528 = vxor.u32 %v527, 2147483648
    %v529 = vmul.f32 %v528, 1.442695
    %v530 = vpow.pop %v529
    %v531 = vadd.f32 %v530, 1.0
    %v532 = vrcp.pop %v531
    %v533 = vmul.f32 1.0, %v532
    %v534 = vadd.f32 %v524, %v328
    %536 = vrot.lane.b32.xlu0 %v534, 64
    %v537 = vpop.permute.xlu0 %536
    %v539 = vmul.f32 %v533, %v537
    %541 = vrot.lane.b32.xlu0 %v539, 64
    %v542 = vpop.permute.xlu0 %541
    %v544 = vadd.f32 %v196, %v542
    %v545 = vtanh.pop %v544
    %v546 = vsub.f32 1.0, %v533
    %548 = vrot.lane.b32.xlu0 %v545, 96
    %v549 = vpop.permute.xlu0 %548
    %v551 = vmul.f32 %v546, %v549
    %v552 = vmul.f32 %v533, %v451
    %v553 = vadd.f32 %v551, %v552
    %555 = vrot.lane.b32.xlu0 %v553, 96
    %v556 = vpop.permute.xlu0 %555
    %v557 = vsel %vm247, %v556, 0
    %559 = vmatprep.subr.mxu0 0.0
    %560 = vmatpush1.msra.mxu0 %v76
    %561 = vmatprep.subr.mxu0 0.0
    %562 = vmatpush1.msra.mxu0 %v77
    %563 = vmatprep.subr.mxu0 0.0
    %564 = vmatpush1.msra.mxu0 %v78
    %565 = vmatprep.subr.mxu0 0.0
    %566 = vmatpush1.msra.mxu0 %v79
    %567 = vmatprep.subr.mxu0 0.0
    %568 = vmatpush1.msra.mxu0 0.0
    %569 = vmatprep.subr.mxu0 0.0
    %570 = vmatpush1.msra.mxu0 0.0
    %571 = vmatprep.subr.mxu0 0.0
    %572 = vmatpush1.msra.mxu0 0.0
    %573 = vmatprep.subr.mxu0 0.0
    %574 = vmatpush1.msra.mxu0 0.0
    %575 = vmatprep.subr.mxu0 0.0
    %576 = vmatpush1.msra.mxu0 0.0
    %577 = vmatprep.subr.mxu0 0.0
    %578 = vmatpush1.msra.mxu0 0.0
    %579 = vmatprep.subr.mxu0 0.0
    %580 = vmatpush1.msra.mxu0 0.0
    %581 = vmatprep.subr.mxu0 0.0
    %582 = vmatpush1.msra.mxu0 0.0
    %583 = vmatprep.subr.mxu0 0.0
    %584 = vmatpush1.msra.mxu0 0.0
    %585 = vmatprep.subr.mxu0 0.0
    %586 = vmatpush1.msra.mxu0 0.0
    %587 = vmatprep.subr.mxu0 0.0
    %588 = vmatpush1.msra.mxu0 0.0
    %589 = vmatprep.subr.mxu0 0.0
    %590 = vmatpush1.msra.mxu0 0.0
    %591 = vmatprep.subr.mxu0 0.0
    %592 = vmatpush1.msra.mxu0 0.0
    %593 = vmatprep.subr.mxu0 0.0
    %594 = vmatpush1.msra.mxu0 0.0
    %595 = vmatprep.subr.mxu0 0.0
    %596 = vmatpush1.msra.mxu0 0.0
    %597 = vmatprep.subr.mxu0 0.0
    %598 = vmatpush1.msra.mxu0 0.0
    %599 = vmatprep.subr.mxu0 0.0
    %600 = vmatpush1.msra.mxu0 0.0
    %601 = vmatprep.subr.mxu0 0.0
    %602 = vmatpush1.msra.mxu0 0.0
    %603 = vmatprep.subr.mxu0 0.0
    %604 = vmatpush1.msra.mxu0 0.0
    %605 = vmatprep.subr.mxu0 0.0
    %606 = vmatpush1.msra.mxu0 0.0
    %607 = vmatprep.subr.mxu0 0.0
    %608 = vmatpush1.msra.mxu0 0.0
    %609 = vmatprep.subr.mxu0 0.0
    %610 = vmatpush1.msra.mxu0 0.0
    %611 = vmatprep.subr.mxu0 0.0
    %612 = vmatpush1.msra.mxu0 0.0
    %613 = vmatprep.subr.mxu0 0.0
    %614 = vmatpush1.msra.mxu0 0.0
    %615 = vmatprep.subr.mxu0 0.0
    %616 = vmatpush1.msra.mxu0 0.0
    %617 = vmatprep.subr.mxu0 0.0
    %618 = vmatpush1.msra.mxu0 0.0
    %619 = vmatprep.subr.mxu0 0.0
    %620 = vmatpush1.msra.mxu0 0.0
    %621 = vmatprep.subr.mxu0 0.0
    %622 = vmatpush1.msra.mxu0 0.0
    %623 = vmatprep.mubr.f32.mxu0 0.0
    %624 = vmatmul.mubr.f32.gmra.mrb[0].mxu0 %v557
    %v625 = vpop.f32.mrb[0].mxu0
    %v626 = vadd.f32 0.0, %v625
    %v627 = vpop.f32.mrb[0].mxu0
    %628 = vdwg.mxu0
    %v629 = vadd.f32 %v201, %v626
    %v630 = vxor.u32 %v629, 2147483648
    %v631 = vmul.f32 %v630, 1.442695
    %v632 = vpow.pop %v631
    %v633 = vadd.f32 %v632, 1.0
    %v634 = vrcp.pop %v633
    %v635 = vmul.f32 1.0, %v634
    %v636 = vadd.f32 %v626, %v328
    %638 = vrot.lane.b32.xlu0 %v636, 64
    %v639 = vpop.permute.xlu0 %638
    %v641 = vmul.f32 %v635, %v639
    %643 = vrot.lane.b32.xlu0 %v641, 64
    %v644 = vpop.permute.xlu0 %643
    %v646 = vadd.f32 %v201, %v644
    %v647 = vtanh.pop %v646
    %v648 = vsub.f32 1.0, %v635
    %650 = vrot.lane.b32.xlu0 %v647, 96
    %v651 = vpop.permute.xlu0 %650
    %v653 = vmul.f32 %v648, %v651
    %v654 = vmul.f32 %v635, %v553
    %v655 = vadd.f32 %v653, %v654
    %657 = vrot.lane.b32.xlu0 %v655, 96
    %v658 = vpop.permute.xlu0 %657
    %v659 = vsel %vm247, %v658, 0
    %661 = vmatprep.subr.mxu0 0.0
    %662 = vmatpush1.msra.mxu0 %v76
    %663 = vmatprep.subr.mxu0 0.0
    %664 = vmatpush1.msra.mxu0 %v77
    %665 = vmatprep.subr.mxu0 0.0
    %666 = vmatpush1.msra.mxu0 %v78
    %667 = vmatprep.subr.mxu0 0.0
    %668 = vmatpush1.msra.mxu0 %v79
    %669 = vmatprep.subr.mxu0 0.0
    %670 = vmatpush1.msra.mxu0 0.0
    %671 = vmatprep.subr.mxu0 0.0
    %672 = vmatpush1.msra.mxu0 0.0
    %673 = vmatprep.subr.mxu0 0.0
    %674 = vmatpush1.msra.mxu0 0.0
    %675 = vmatprep.subr.mxu0 0.0
    %676 = vmatpush1.msra.mxu0 0.0
    %677 = vmatprep.subr.mxu0 0.0
    %678 = vmatpush1.msra.mxu0 0.0
    %679 = vmatprep.subr.mxu0 0.0
    %680 = vmatpush1.msra.mxu0 0.0
    %681 = vmatprep.subr.mxu0 0.0
    %682 = vmatpush1.msra.mxu0 0.0
    %683 = vmatprep.subr.mxu0 0.0
    %684 = vmatpush1.msra.mxu0 0.0
    %685 = vmatprep.subr.mxu0 0.0
    %686 = vmatpush1.msra.mxu0 0.0
    %687 = vmatprep.subr.mxu0 0.0
    %688 = vmatpush1.msra.mxu0 0.0
    %689 = vmatprep.subr.mxu0 0.0
    %690 = vmatpush1.msra.mxu0 0.0
    %691 = vmatprep.subr.mxu0 0.0
    %692 = vmatpush1.msra.mxu0 0.0
    %693 = vmatprep.subr.mxu0 0.0
    %694 = vmatpush1.msra.mxu0 0.0
    %695 = vmatprep.subr.mxu0 0.0
    %696 = vmatpush1.msra.mxu0 0.0
    %697 = vmatprep.subr.mxu0 0.0
    %698 = vmatpush1.msra.mxu0 0.0
    %699 = vmatprep.subr.mxu0 0.0
    %700 = vmatpush1.msra.mxu0 0.0
    %701 = vmatprep.subr.mxu0 0.0
    %702 = vmatpush1.msra.mxu0 0.0
    %703 = vmatprep.subr.mxu0 0.0
    %704 = vmatpush1.msra.mxu0 0.0
    %705 = vmatprep.subr.mxu0 0.0
    %706 = vmatpush1.msra.mxu0 0.0
    %707 = vmatprep.subr.mxu0 0.0
    %708 = vmatpush1.msra.mxu0 0.0
    %709 = vmatprep.subr.mxu0 0.0
    %710 = vmatpush1.msra.mxu0 0.0
    %711 = vmatprep.subr.mxu0 0.0
    %712 = vmatpush1.msra.mxu0 0.0
    %713 = vmatprep.subr.mxu0 0.0
    %714 = vmatpush1.msra.mxu0 0.0
    %715 = vmatprep.subr.mxu0 0.0
    %716 = vmatpush1.msra.mxu0 0.0
    %717 = vmatprep.subr.mxu0 0.0
    %718 = vmatpush1.msra.mxu0 0.0
    %719 = vmatprep.subr.mxu0 0.0
    %720 = vmatpush1.msra.mxu0 0.0
    %721 = vmatprep.subr.mxu0 0.0
    %722 = vmatpush1.msra.mxu0 0.0
    %723 = vmatprep.subr.mxu0 0.0
    %724 = vmatpush1.msra.mxu0 0.0
    %725 = vmatprep.mubr.f32.mxu0 0.0
    %726 = vmatmul.mubr.f32.gmra.mrb[0].mxu0 %v659
    %v727 = vpop.f32.mrb[0].mxu0
    %v728 = vadd.f32 0.0, %v727
    %v729 = vpop.f32.mrb[0].mxu0
    %730 = vdwg.mxu0
    %v731 = vadd.f32 %v206, %v728
    %v732 = vxor.u32 %v731, 2147483648
    %v733 = vmul.f32 %v732, 1.442695
    %v734 = vpow.pop %v733
    %v735 = vadd.f32 %v734, 1.0
    %v736 = vrcp.pop %v735
    %v737 = vmul.f32 1.0, %v736
    %v738 = vadd.f32 %v728, %v328
    %740 = vrot.lane.b32.xlu0 %v738, 64
    %v741 = vpop.permute.xlu0 %740
    %v743 = vmul.f32 %v737, %v741
    %745 = vrot.lane.b32.xlu0 %v743, 64
    %v746 = vpop.permute.xlu0 %745
    %v748 = vadd.f32 %v206, %v746
    %v749 = vtanh.pop %v748
    %v750 = vsub.f32 1.0, %v737
    %752 = vrot.lane.b32.xlu0 %v749, 96
    %v753 = vpop.permute.xlu0 %752
    %v755 = vmul.f32 %v750, %v753
    %v756 = vmul.f32 %v737, %v655
    %v757 = vadd.f32 %v755, %v756
    %759 = vrot.lane.b32.xlu0 %v757, 96
    %v760 = vpop.permute.xlu0 %759
    %v761 = vsel %vm247, %v760, 0
    %763 = vmatprep.subr.mxu0 0.0
    %764 = vmatpush1.msra.mxu0 %v76
    %765 = vmatprep.subr.mxu0 0.0
    %766 = vmatpush1.msra.mxu0 %v77
    %767 = vmatprep.subr.mxu0 0.0
    %768 = vmatpush1.msra.mxu0 %v78
    %769 = vmatprep.subr.mxu0 0.0
    %770 = vmatpush1.msra.mxu0 %v79
    %771 = vmatprep.subr.mxu0 0.0
    %772 = vmatpush1.msra.mxu0 0.0
    %773 = vmatprep.subr.mxu0 0.0
    %774 = vmatpush1.msra.mxu0 0.0
    %775 = vmatprep.subr.mxu0 0.0
    %776 = vmatpush1.msra.mxu0 0.0
    %777 = vmatprep.subr.mxu0 0.0
    %778 = vmatpush1.msra.mxu0 0.0
    %779 = vmatprep.subr.mxu0 0.0
    %780 = vmatpush1.msra.mxu0 0.0
    %781 = vmatprep.subr.mxu0 0.0
    %782 = vmatpush1.msra.mxu0 0.0
    %783 = vmatprep.subr.mxu0 0.0
    %784 = vmatpush1.msra.mxu0 0.0
    %785 = vmatprep.subr.mxu0 0.0
    %786 = vmatpush1.msra.mxu0 0.0
    %787 = vmatprep.subr.mxu0 0.0
    %788 = vmatpush1.msra.mxu0 0.0
    %789 = vmatprep.subr.mxu0 0.0
    %790 = vmatpush1.msra.mxu0 0.0
    %791 = vmatprep.subr.mxu0 0.0
    %792 = vmatpush1.msra.mxu0 0.0
    %793 = vmatprep.subr.mxu0 0.0
    %794 = vmatpush1.msra.mxu0 0.0
    %795 = vmatprep.subr.mxu0 0.0
    %796 = vmatpush1.msra.mxu0 0.0
    %797 = vmatprep.subr.mxu0 0.0
    %798 = vmatpush1.msra.mxu0 0.0
    %799 = vmatprep.subr.mxu0 0.0
    %800 = vmatpush1.msra.mxu0 0.0
    %801 = vmatprep.subr.mxu0 0.0
    %802 = vmatpush1.msra.mxu0 0.0
    %803 = vmatprep.subr.mxu0 0.0
    %804 = vmatpush1.msra.mxu0 0.0
    %805 = vmatprep.subr.mxu0 0.0
    %806 = vmatpush1.msra.mxu0 0.0
    %807 = vmatprep.subr.mxu0 0.0
    %808 = vmatpush1.msra.mxu0 0.0
    %809 = vmatprep.subr.mxu0 0.0
    %810 = vmatpush1.msra.mxu0 0.0
    %811 = vmatprep.subr.mxu0 0.0
    %812 = vmatpush1.msra.mxu0 0.0
    %813 = vmatprep.subr.mxu0 0.0
    %814 = vmatpush1.msra.mxu0 0.0
    %815 = vmatprep.subr.mxu0 0.0
    %816 = vmatpush1.msra.mxu0 0.0
    %817 = vmatprep.subr.mxu0 0.0
    %818 = vmatpush1.msra.mxu0 0.0
    %819 = vmatprep.subr.mxu0 0.0
    %820 = vmatpush1.msra.mxu0 0.0
    %821 = vmatprep.subr.mxu0 0.0
    %822 = vmatpush1.msra.mxu0 0.0
    %823 = vmatprep.subr.mxu0 0.0
    %824 = vmatpush1.msra.mxu0 0.0
    %825 = vmatprep.subr.mxu0 0.0
    %826 = vmatpush1.msra.mxu0 0.0
    %827 = vmatprep.mubr.f32.mxu0 0.0
    %828 = vmatmul.mubr.f32.gmra.mrb[0].mxu0 %v761
    %v829 = vpop.f32.mrb[0].mxu0
    %v830 = vadd.f32 0.0, %v829
    %v831 = vpop.f32.mrb[0].mxu0
    %832 = vdwg.mxu0
    %v833 = vadd.f32 %v211, %v830
    %v834 = vxor.u32 %v833, 2147483648
    %v835 = vmul.f32 %v834, 1.442695
    %v836 = vpow.pop %v835
    %v837 = vadd.f32 %v836, 1.0
    %v838 = vrcp.pop %v837
    %v839 = vmul.f32 1.0, %v838
    %v840 = vadd.f32 %v830, %v328
    %842 = vrot.lane.b32.xlu0 %v840, 64
    %v843 = vpop.permute.xlu0 %842
    %v845 = vmul.f32 %v839, %v843
    %847 = vrot.lane.b32.xlu0 %v845, 64
    %v848 = vpop.permute.xlu0 %847
    %v850 = vadd.f32 %v211, %v848
    %v851 = vtanh.pop %v850
    %v852 = vsub.f32 1.0, %v839
    %854 = vrot.lane.b32.xlu0 %v851, 96
    %v855 = vpop.permute.xlu0 %854
    %v857 = vmul.f32 %v852, %v855
    %v858 = vmul.f32 %v839, %v757
    %v859 = vadd.f32 %v857, %v858
    %861 = vrot.lane.b32.xlu0 %v859, 96
    %v862 = vpop.permute.xlu0 %861
    %v863 = vsel %vm247, %v862, 0
    %865 = vmatprep.subr.mxu0 0.0
    %866 = vmatpush1.msra.mxu0 %v76
    %867 = vmatprep.subr.mxu0 0.0
    %868 = vmatpush1.msra.mxu0 %v77
    %869 = vmatprep.subr.mxu0 0.0
    %870 = vmatpush1.msra.mxu0 %v78
    %871 = vmatprep.subr.mxu0 0.0
    %872 = vmatpush1.msra.mxu0 %v79
    %873 = vmatprep.subr.mxu0 0.0
    %874 = vmatpush1.msra.mxu0 0.0
    %875 = vmatprep.subr.mxu0 0.0
    %876 = vmatpush1.msra.mxu0 0.0
    %877 = vmatprep.subr.mxu0 0.0
    %878 = vmatpush1.msra.mxu0 0.0
    %879 = vmatprep.subr.mxu0 0.0
    %880 = vmatpush1.msra.mxu0 0.0
    %881 = vmatprep.subr.mxu0 0.0
    %882 = vmatpush1.msra.mxu0 0.0
    %883 = vmatprep.subr.mxu0 0.0
    %884 = vmatpush1.msra.mxu0 0.0
    %885 = vmatprep.subr.mxu0 0.0
    %886 = vmatpush1.msra.mxu0 0.0
    %887 = vmatprep.subr.mxu0 0.0
    %888 = vmatpush1.msra.mxu0 0.0
    %889 = vmatprep.subr.mxu0 0.0
    %890 = vmatpush1.msra.mxu0 0.0
    %891 = vmatprep.subr.mxu0 0.0
    %892 = vmatpush1.msra.mxu0 0.0
    %893 = vmatprep.subr.mxu0 0.0
    %894 = vmatpush1.msra.mxu0 0.0
    %895 = vmatprep.subr.mxu0 0.0
    %896 = vmatpush1.msra.mxu0 0.0
    %897 = vmatprep.subr.mxu0 0.0
    %898 = vmatpush1.msra.mxu0 0.0
    %899 = vmatprep.subr.mxu0 0.0
    %900 = vmatpush1.msra.mxu0 0.0
    %901 = vmatprep.subr.mxu0 0.0
    %902 = vmatpush1.msra.mxu0 0.0
    %903 = vmatprep.subr.mxu0 0.0
    %904 = vmatpush1.msra.mxu0 0.0
    %905 = vmatprep.subr.mxu0 0.0
    %906 = vmatpush1.msra.mxu0 0.0
    %907 = vmatprep.subr.mxu0 0.0
    %908 = vmatpush1.msra.mxu0 0.0
    %909 = vmatprep.subr.mxu0 0.0
    %910 = vmatpush1.msra.mxu0 0.0
    %911 = vmatprep.subr.mxu0 0.0
    %912 = vmatpush1.msra.mxu0 0.0
    %913 = vmatprep.subr.mxu0 0.0
    %914 = vmatpush1.msra.mxu0 0.0
    %915 = vmatprep.subr.mxu0 0.0
    %916 = vmatpush1.msra.mxu0 0.0
    %917 = vmatprep.subr.mxu0 0.0
    %918 = vmatpush1.msra.mxu0 0.0
    %919 = vmatprep.subr.mxu0 0.0
    %920 = vmatpush1.msra.mxu0 0.0
    %921 = vmatprep.subr.mxu0 0.0
    %922 = vmatpush1.msra.mxu0 0.0
    %923 = vmatprep.subr.mxu0 0.0
    %924 = vmatpush1.msra.mxu0 0.0
    %925 = vmatprep.subr.mxu0 0.0
    %926 = vmatpush1.msra.mxu0 0.0
    %927 = vmatprep.subr.mxu0 0.0
    %928 = vmatpush1.msra.mxu0 0.0
    %929 = vmatprep.mubr.f32.mxu0 0.0
    %930 = vmatmul.mubr.f32.gmra.mrb[0].mxu0 %v863
    %v931 = vpop.f32.mrb[0].mxu0
    %v932 = vadd.f32 0.0, %v931
    %v933 = vpop.f32.mrb[0].mxu0
    %934 = vdwg.mxu0
    %v935 = vadd.f32 %v216, %v932
    %v936 = vxor.u32 %v935, 2147483648
    %v937 = vmul.f32 %v936, 1.442695
    %v938 = vpow.pop %v937
    %v939 = vadd.f32 %v938, 1.0
    %v940 = vrcp.pop %v939
    %v941 = vmul.f32 1.0, %v940
    %v942 = vadd.f32 %v932, %v328
    %944 = vrot.lane.b32.xlu0 %v942, 64
    %v945 = vpop.permute.xlu0 %944
    %v947 = vmul.f32 %v941, %v945
    %949 = vrot.lane.b32.xlu0 %v947, 64
    %v950 = vpop.permute.xlu0 %949
    %v952 = vadd.f32 %v216, %v950
    %v953 = vtanh.pop %v952
    %v954 = vsub.f32 1.0, %v941
    %956 = vrot.lane.b32.xlu0 %v953, 96
    %v957 = vpop.permute.xlu0 %956
    %v959 = vmul.f32 %v954, %v957
    %v960 = vmul.f32 %v941, %v859
    %v961 = vadd.f32 %v959, %v960
    %963 = vrot.lane.b32.xlu0 %v451, 32
    %v964 = vpop.permute.xlu0 %963
    %966 = vrot.lane.b32.xlu0 %v553, 64
    %v967 = vpop.permute.xlu0 %966
    %970 = vrot.lane.b32.xlu0 %v859, 32
    %v971 = vpop.permute.xlu0 %970
    %974 = vrot.lane.b32.xlu0 %v961, 64
    %v975 = vpop.permute.xlu0 %974
    %v977 = vsel %vm247, %v246, %v349
    %vm978 = vcmask 523264
    %v979 = vsel %vm978, %v977, %v964
    %vm980 = vcmask 785408
    %v981 = vsel %vm980, %v979, %v967
    %v982 = vsel %vm247, %v658, %v757
    %v983 = vsel %vm978, %v982, %v971
    %v984 = vsel %vm980, %v983, %v975
    %v985 = vld [vmem:[%s5] sm:$0xff]
    %v986 = vld [vmem:[%s5 + $0x8] sm:$0xff]
    %v987 = vld [vmem:[%s5 + $0x10] sm:$0xff]
    %v988 = vld [vmem:[%s5 + $0x18] sm:$0xff]
    %v989 = vld [vmem:[#allocation2] sm:$0xff]
    %v990 = vld [vmem:[#allocation2 + $0x8] sm:$0xff]
    %v991 = vld [vmem:[#allocation2 + $0x10] sm:$0xff]
    %v992 = vld [vmem:[#allocation2 + $0x18] sm:$0xff]
    %v993 = vld [vmem:[#allocation2 + $0x20] sm:$0xff]
    %v994 = vld [vmem:[#allocation2 + $0x28] sm:$0xff]
    %v995 = vld [vmem:[#allocation2 + $0x30] sm:$0xff]
    %v996 = vld [vmem:[#allocation2 + $0x38] sm:$0xff]
    %v997 = vld [vmem:[#allocation2 + $0x40] sm:$0xff]
    %v998 = vld [vmem:[#allocation2 + $0x48] sm:$0xff]
    %v999 = vld [vmem:[#allocation2 + $0x50] sm:$0xff]
    %v1000 = vld [vmem:[#allocation2 + $0x58] sm:$0xff]
    %v1001 = vld [vmem:[#allocation2 + $0x60] sm:$0xff]
    %v1002 = vld [vmem:[#allocation2 + $0x68] sm:$0xff]
    %v1003 = vld [vmem:[#allocation2 + $0x70] sm:$0xff]
    %v1004 = vld [vmem:[#allocation2 + $0x78] sm:$0xff]
    %v1005 = vld [vmem:[#allocation2 + $0x80] sm:$0xff]
    %v1006 = vld [vmem:[#allocation2 + $0x88] sm:$0xff]
    %v1007 = vld [vmem:[#allocation2 + $0x90] sm:$0xff]
    %v1008 = vld [vmem:[#allocation2 + $0x98] sm:$0xff]
    %v1009 = vld [vmem:[#allocation2 + $0xa0] sm:$0xff]
    %v1010 = vld [vmem:[#allocation2 + $0xa8] sm:$0xff]
    %v1011 = vld [vmem:[#allocation2 + $0xb0] sm:$0xff]
    %v1012 = vld [vmem:[#allocation2 + $0xb8] sm:$0xff]
    %v1013 = vld [vmem:[#allocation2 + $0xc0] sm:$0xff]
    %v1014 = vld [vmem:[#allocation2 + $0xc8] sm:$0xff]
    %v1015 = vld [vmem:[#allocation2 + $0xd0] sm:$0xff]
    %v1016 = vld [vmem:[#allocation2 + $0xd8] sm:$0xff]
    %v1018 = vsel %vm980, %v984, 0
    %1020 = vmatprep.subr.mxu0 0.0
    %1021 = vmatpush1.msra.mxu0 %v989
    %1022 = vmatprep.subr.mxu0 0.0
    %1023 = vmatpush1.msra.mxu0 %v990
    %1024 = vmatprep.subr.mxu0 0.0
    %1025 = vmatpush1.msra.mxu0 %v991
    %1026 = vmatprep.subr.mxu0 0.0
    %1027 = vmatpush1.msra.mxu0 %v992
    %1028 = vmatprep.subr.mxu0 0.0
    %1029 = vmatpush1.msra.mxu0 %v993
    %1030 = vmatprep.subr.mxu0 0.0
    %1031 = vmatpush1.msra.mxu0 %v994
    %1032 = vmatprep.subr.mxu0 0.0
    %1033 = vmatpush1.msra.mxu0 %v995
    %1034 = vmatprep.subr.mxu0 0.0
    %1035 = vmatpush1.msra.mxu0 %v996
    %1036 = vmatprep.subr.mxu0 0.0
    %1037 = vmatpush1.msra.mxu0 %v997
    %1038 = vmatprep.subr.mxu0 0.0
    %1039 = vmatpush1.msra.mxu0 %v998
    %1040 = vmatprep.subr.mxu0 0.0
    %1041 = vmatpush1.msra.mxu0 %v999
    %1042 = vmatprep.subr.mxu0 0.0
    %1043 = vmatpush1.msra.mxu0 %v1000
    %1044 = vmatprep.subr.mxu0 0.0
    %1045 = vmatpush1.msra.mxu0 %v1001
    %1046 = vmatprep.subr.mxu0 0.0
    %1047 = vmatpush1.msra.mxu0 %v1002
    %1048 = vmatprep.subr.mxu0 0.0
    %1049 = vmatpush1.msra.mxu0 %v1003
    %1050 = vmatprep.subr.mxu0 0.0
    %1051 = vmatpush1.msra.mxu0 %v1004
    %1052 = vmatprep.subr.mxu0 0.0
    %1053 = vmatpush1.msra.mxu0 %v1005
    %1054 = vmatprep.subr.mxu0 0.0
    %1055 = vmatpush1.msra.mxu0 %v1006
    %1056 = vmatprep.subr.mxu0 0.0
    %1057 = vmatpush1.msra.mxu0 %v1007
    %1058 = vmatprep.subr.mxu0 0.0
    %1059 = vmatpush1.msra.mxu0 %v1008
    %1060 = vmatprep.subr.mxu0 0.0
    %1061 = vmatpush1.msra.mxu0 %v1009
    %1062 = vmatprep.subr.mxu0 0.0
    %1063 = vmatpush1.msra.mxu0 %v1010
    %1064 = vmatprep.subr.mxu0 0.0
    %1065 = vmatpush1.msra.mxu0 %v1011
    %1066 = vmatprep.subr.mxu0 0.0
    %1067 = vmatpush1.msra.mxu0 %v1012
    %1068 = vmatprep.subr.mxu0 0.0
    %1069 = vmatpush1.msra.mxu0 %v1013
    %1070 = vmatprep.subr.mxu0 0.0
    %1071 = vmatpush1.msra.mxu0 %v1014
    %1072 = vmatprep.subr.mxu0 0.0
    %1073 = vmatpush1.msra.mxu0 %v1015
    %1074 = vmatprep.subr.mxu0 0.0
    %1075 = vmatpush1.msra.mxu0 %v1016
    %1076 = vmatprep.subr.mxu0 0.0
    %1077 = vmatpush1.msra.mxu0 0.0
    %1078 = vmatprep.subr.mxu0 0.0
    %1079 = vmatpush1.msra.mxu0 0.0
    %1080 = vmatprep.subr.mxu0 0.0
    %1081 = vmatpush1.msra.mxu0 0.0
    %1082 = vmatprep.subr.mxu0 0.0
    %1083 = vmatpush1.msra.mxu0 0.0
    %1084 = vmatprep.mubr.f32.mxu0 %v1018
    %1085 = vmatmul.mubr.f32.gmra.mrb[0].mxu0 %v981
    %v1086 = vpop.f32.mrb[0].mxu0
    %v1087 = vadd.f32 0.0, %v1086
    %v1088 = vpop.f32.mrb[0].mxu0
    %1089 = vdwg.mxu0
    %1090 = vrot.lane.b32.xlu0 %v961, 96
    %v1091 = vpop.permute.xlu0 %1090
    %v1092 = vsel %vm247, %v1091, 0
    %1094 = vmatprep.subr.mxu0 0.0
    %1095 = vmatpush1.msra.mxu0 %v985
    %1096 = vmatprep.subr.mxu0 0.0
    %1097 = vmatpush1.msra.mxu0 %v986
    %1098 = vmatprep.subr.mxu0 0.0
    %1099 = vmatpush1.msra.mxu0 %v987
    %1100 = vmatprep.subr.mxu0 0.0
    %1101 = vmatpush1.msra.mxu0 %v988
    %1102 = vmatprep.subr.mxu0 0.0
    %1103 = vmatpush1.msra.mxu0 0.0
    %1104 = vmatprep.subr.mxu0 0.0
    %1105 = vmatpush1.msra.mxu0 0.0
    %1106 = vmatprep.subr.mxu0 0.0
    %1107 = vmatpush1.msra.mxu0 0.0
    %1108 = vmatprep.subr.mxu0 0.0
    %1109 = vmatpush1.msra.mxu0 0.0
    %1110 = vmatprep.subr.mxu0 0.0
    %1111 = vmatpush1.msra.mxu0 0.0
    %1112 = vmatprep.subr.mxu0 0.0
    %1113 = vmatpush1.msra.mxu0 0.0
    %1114 = vmatprep.subr.mxu0 0.0
    %1115 = vmatpush1.msra.mxu0 0.0
    %1116 = vmatprep.subr.mxu0 0.0
    %1117 = vmatpush1.msra.mxu0 0.0
    %1118 = vmatprep.subr.mxu0 0.0
    %1119 = vmatpush1.msra.mxu0 0.0
    %1120 = vmatprep.subr.mxu0 0.0
    %1121 = vmatpush1.msra.mxu0 0.0
    %1122 = vmatprep.subr.mxu0 0.0
    %1123 = vmatpush1.msra.mxu0 0.0
    %1124 = vmatprep.subr.mxu0 0.0
    %1125 = vmatpush1.msra.mxu0 0.0
    %1126 = vmatprep.subr.mxu0 0.0
    %1127 = vmatpush1.msra.mxu0 0.0
    %1128 = vmatprep.subr.mxu0 0.0
    %1129 = vmatpush1.msra.mxu0 0.0
    %1130 = vmatprep.subr.mxu0 0.0
    %1131 = vmatpush1.msra.mxu0 0.0
    %1132 = vmatprep.subr.mxu0 0.0
    %1133 = vmatpush1.msra.mxu0 0.0
    %1134 = vmatprep.subr.mxu0 0.0
    %1135 = vmatpush1.msra.mxu0 0.0
    %1136 = vmatprep.subr.mxu0 0.0
    %1137 = vmatpush1.msra.mxu0 0.0
    %1138 = vmatprep.subr.mxu0 0.0
    %1139 = vmatpush1.msra.mxu0 0.0
    %1140 = vmatprep.subr.mxu0 0.0
    %1141 = vmatpush1.msra.mxu0 0.0
    %1142 = vmatprep.subr.mxu0 0.0
    %1143 = vmatpush1.msra.mxu0 0.0
    %1144 = vmatprep.subr.mxu0 0.0
    %1145 = vmatpush1.msra.mxu0 0.0
    %1146 = vmatprep.subr.mxu0 0.0
    %1147 = vmatpush1.msra.mxu0 0.0
    %1148 = vmatprep.subr.mxu0 0.0
    %1149 = vmatpush1.msra.mxu0 0.0
    %1150 = vmatprep.subr.mxu0 0.0
    %1151 = vmatpush1.msra.mxu0 0.0
    %1152 = vmatprep.subr.mxu0 0.0
    %1153 = vmatpush1.msra.mxu0 0.0
    %1154 = vmatprep.subr.mxu0 0.0
    %1155 = vmatpush1.msra.mxu0 0.0
    %1156 = vmatprep.subr.mxu0 0.0
    %1157 = vmatpush1.msra.mxu0 0.0
    %1158 = vmatprep.mubr.f32.mxu0 0.0
    %1159 = vmatmul.mubr.f32.gmra.mrb[0].mxu0 %v1092
    %v1160 = vpop.f32.mrb[0].mxu0
    %v1161 = vadd.f32 %v1087, %v1160
    %v1162 = vpop.f32.mrb[0].mxu0
    %1163 = vdwg.mxu0
    %v1164 = vtanh.pop %v1161
    %v1165 = vld [vmem:[%s7] sm:$0xff]
    %v1166 = vld [vmem:[%s7 + $0x8] sm:$0xff]
    %v1167 = vld [vmem:[%s7 + $0x10] sm:$0xff]
    %v1168 = vld [vmem:[%s7 + $0x18] sm:$0xff]
    %v1169 = vld [vmem:[%s7 + $0x20] sm:$0xff]
    %v1170 = vld [vmem:[%s7 + $0x28] sm:$0xff]
    %v1171 = vld [vmem:[%s7 + $0x30] sm:$0xff]
    %v1172 = vld [vmem:[%s7 + $0x38] sm:$0xff]
    %v1173 = vld [vmem:[%s7 + $0x40] sm:$0xff]
    %v1174 = vld [vmem:[%s7 + $0x48] sm:$0xff]
    %v1175 = vld [vmem:[%s7 + $0x50] sm:$0xff]
    %v1176 = vld [vmem:[%s7 + $0x58] sm:$0xff]
    %v1177 = vld [vmem:[%s7 + $0x60] sm:$0xff]
    %v1178 = vld [vmem:[%s7 + $0x68] sm:$0xff]
    %vm1179 = vcmask 916480
    %v1181 = vsel %vm1179, %v1164, 0
    %1183 = vmatprep.subr.mxu0 0.0
    %1184 = vmatpush1.msra.mxu0 %v1165
    %1185 = vmatprep.subr.mxu0 0.0
    %1186 = vmatpush1.msra.mxu0 %v1166
    %1187 = vmatprep.subr.mxu0 0.0
    %1188 = vmatpush1.msra.mxu0 %v1167
    %1189 = vmatprep.subr.mxu0 0.0
    %1190 = vmatpush1.msra.mxu0 %v1168
    %1191 = vmatprep.subr.mxu0 0.0
    %1192 = vmatpush1.msra.mxu0 %v1169
    %1193 = vmatprep.subr.mxu0 0.0
    %1194 = vmatpush1.msra.mxu0 %v1170
    %1195 = vmatprep.subr.mxu0 0.0
    %1196 = vmatpush1.msra.mxu0 %v1171
    %1197 = vmatprep.subr.mxu0 0.0
    %1198 = vmatpush1.msra.mxu0 %v1172
    %1199 = vmatprep.subr.mxu0 0.0
    %1200 = vmatpush1.msra.mxu0 %v1173
    %1201 = vmatprep.subr.mxu0 0.0
    %1202 = vmatpush1.msra.mxu0 %v1174
    %1203 = vmatprep.subr.mxu0 0.0
    %1204 = vmatpush1.msra.mxu0 %v1175
    %1205 = vmatprep.subr.mxu0 0.0
    %1206 = vmatpush1.msra.mxu0 %v1176
    %1207 = vmatprep.subr.mxu0 0.0
    %1208 = vmatpush1.msra.mxu0 %v1177
    %1209 = vmatprep.subr.mxu0 0.0
    %1210 = vmatpush1.msra.mxu0 %v1178
    %1211 = vmatprep.subr.mxu0 0.0
    %1212 = vmatpush1.msra.mxu0 0.0
    %1213 = vmatprep.subr.mxu0 0.0
    %1214 = vmatpush1.msra.mxu0 0.0
    %1215 = vmatprep.subr.mxu0 0.0
    %1216 = vmatpush1.msra.mxu0 0.0
    %1217 = vmatprep.subr.mxu0 0.0
    %1218 = vmatpush1.msra.mxu0 0.0
    %1219 = vmatprep.subr.mxu0 0.0
    %1220 = vmatpush1.msra.mxu0 0.0
    %1221 = vmatprep.subr.mxu0 0.0
    %1222 = vmatpush1.msra.mxu0 0.0
    %1223 = vmatprep.subr.mxu0 0.0
    %1224 = vmatpush1.msra.mxu0 0.0
    %1225 = vmatprep.subr.mxu0 0.0
    %1226 = vmatpush1.msra.mxu0 0.0
    %1227 = vmatprep.subr.mxu0 0.0
    %1228 = vmatpush1.msra.mxu0 0.0
    %1229 = vmatprep.subr.mxu0 0.0
    %1230 = vmatpush1.msra.mxu0 0.0
    %1231 = vmatprep.subr.mxu0 0.0
    %1232 = vmatpush1.msra.mxu0 0.0
    %1233 = vmatprep.subr.mxu0 0.0
    %1234 = vmatpush1.msra.mxu0 0.0
    %1235 = vmatprep.subr.mxu0 0.0
    %1236 = vmatpush1.msra.mxu0 0.0
    %1237 = vmatprep.subr.mxu0 0.0
    %1238 = vmatpush1.msra.mxu0 0.0
    %1239 = vmatprep.subr.mxu0 0.0
    %1240 = vmatpush1.msra.mxu0 0.0
    %1241 = vmatprep.subr.mxu0 0.0
    %1242 = vmatpush1.msra.mxu0 0.0
    %1243 = vmatprep.subr.mxu0 0.0
    %1244 = vmatpush1.msra.mxu0 0.0
    %1245 = vmatprep.subr.mxu0 0.0
    %1246 = vmatpush1.msra.mxu0 0.0
    %1247 = vmatprep.mubr.f32.mxu0 0.0
    %1248 = vmatmul.mubr.f32.gmra.mrb[0].mxu0 %v1181
    %v1249 = vpop.f32.mrb[0].mxu0
    %v1250 = vadd.f32 0.0, %v1249
    %v1251 = vpop.f32.mrb[0].mxu0
    %1252 = vdwg.mxu0
    %vm1253 = vcmask 56320
    %v1254 = vsel %vm1253, %v1250, -inf
    %1255 = vmax.xlane.f32.xlu0 %v1254
    %v1256 = vpop.xlane.xlu0 %1255
    %v1257 = vsub.f32 %v1250, %v1256
    %v1258 = vmul.f32 %v1257, 1.442695
    %v1259 = vpow.pop %v1258
    %v1260 = vsel %vm1253, %v1259, 0.0
    %1261 = vadd.xlane.f32.xlu0 %v1260
    %v1262 = vpop.xlane.xlu0 %1261
    %v1263 = vrcp.pop %v1262
    %v1264 = vmul.f32 %v1259, %v1263
    %v1265 = vld [vmem:[%s8] sm:$0x7f]
    %v1266 = vld [vmem:[%s8 + $0x8] sm:$0x7f]
    %v1268 = vsel %vm1253, %v1264, 0
    %vm1270 = vcmask 1046528
    %v1272 = vsel %vm1270, %v1265, 0
    %v1275 = vsel %vm1270, %v1266, 0
    %1277 = vmatprep.subr.mxu0 %v1275
    %1278 = vmatpush1.msra.mxu0 %v1272
    %1279 = vmatprep.subr.mxu0 0.0
    %1280 = vmatpush1.msra.mxu0 0.0
    %1281 = vmatprep.subr.mxu0 0.0
    %1282 = vmatpush1.msra.mxu0 0.0
    %1283 = vmatprep.subr.mxu0 0.0
    %1284 = vmatpush1.msra.mxu0 0.0
    %1285 = vmatprep.subr.mxu0 0.0
    %1286 = vmatpush1.msra.mxu0 0.0
    %1287 = vmatprep.subr.mxu0 0.0
    %1288 = vmatpush1.msra.mxu0 0.0
    %1289 = vmatprep.subr.mxu0 0.0
    %1290 = vmatpush1.msra.mxu0 0.0
    %1291 = vmatprep.subr.mxu0 0.0
    %1292 = vmatpush1.msra.mxu0 0.0
    %1293 = vmatprep.subr.mxu0 0.0
    %1294 = vmatpush1.msra.mxu0 0.0
    %1295 = vmatprep.subr.mxu0 0.0
    %1296 = vmatpush1.msra.mxu0 0.0
    %1297 = vmatprep.subr.mxu0 0.0
    %1298 = vmatpush1.msra.mxu0 0.0
    %1299 = vmatprep.subr.mxu0 0.0
    %1300 = vmatpush1.msra.mxu0 0.0
    %1301 = vmatprep.subr.mxu0 0.0
    %1302 = vmatpush1.msra.mxu0 0.0
    %1303 = vmatprep.subr.mxu0 0.0
    %1304 = vmatpush1.msra.mxu0 0.0
    %1305 = vmatprep.subr.mxu0 0.0
    %1306 = vmatpush1.msra.mxu0 0.0
    %1307 = vmatprep.subr.mxu0 0.0
    %1308 = vmatpush1.msra.mxu0 0.0
    %1309 = vmatprep.subr.mxu0 0.0
    %1310 = vmatpush1.msra.mxu0 0.0
    %1311 = vmatprep.subr.mxu0 0.0
    %1312 = vmatpush1.msra.mxu0 0.0
    %1313 = vmatprep.subr.mxu0 0.0
    %1314 = vmatpush1.msra.mxu0 0.0
    %1315 = vmatprep.subr.mxu0 0.0
    %1316 = vmatpush1.msra.mxu0 0.0
    %1317 = vmatprep.subr.mxu0 0.0
    %1318 = vmatpush1.msra.mxu0 0.0
    %1319 = vmatprep.subr.mxu0 0.0
    %1320 = vmatpush1.msra.mxu0 0.0
    %1321 = vmatprep.subr.mxu0 0.0
    %1322 = vmatpush1.msra.mxu0 0.0
    %1323 = vmatprep.subr.mxu0 0.0
    %1324 = vmatpush1.msra.mxu0 0.0
    %1325 = vmatprep.subr.mxu0 0.0
    %1326 = vmatpush1.msra.mxu0 0.0
    %1327 = vmatprep.subr.mxu0 0.0
    %1328 = vmatpush1.msra.mxu0 0.0
    %1329 = vmatprep.subr.mxu0 0.0
    %1330 = vmatpush1.msra.mxu0 0.0
    %1331 = vmatprep.subr.mxu0 0.0
    %1332 = vmatpush1.msra.mxu0 0.0
    %1333 = vmatprep.subr.mxu0 0.0
    %1334 = vmatpush1.msra.mxu0 0.0
    %1335 = vmatprep.subr.mxu0 0.0
    %1336 = vmatpush1.msra.mxu0 0.0
    %1337 = vmatprep.subr.mxu0 0.0
    %1338 = vmatpush1.msra.mxu0 0.0
    %1339 = vmatprep.subr.mxu0 0.0
    %1340 = vmatpush1.msra.mxu0 0.0
    %1341 = vmatprep.mubr.f32.mxu0 0.0
    %1342 = vmatmul.mubr.f32.gmra.mrb[0].mxu0 %v1268
    %v1343 = vpop.f32.mrb[0].mxu0
    %v1344 = vadd.f32 0.0, %v1343
    %v1345 = vpop.f32.mrb[0].mxu0
    %v1346 = vadd.f32 0.0, %v1345
    %1347 = vdwg.mxu0
    %v1348 = vmul.f32 %v1344, %v981
    %v1349 = vmul.f32 %v1346, %v984
    %v1350 = vld [vmem:[%s9] sm:$0xff]
    %v1351 = vld [vmem:[%s9 + $0x8] sm:$0xff]
    %v1352 = vld [vmem:[%s9 + $0x10] sm:$0xff]
    %v1353 = vld [vmem:[%s9 + $0x18] sm:$0xff]
    %v1354 = vld [vmem:[%s9 + $0x20] sm:$0xff]
    %v1355 = vld [vmem:[%s9 + $0x28] sm:$0xff]
    %v1356 = vld [vmem:[%s9 + $0x30] sm:$0xff]
    %v1357 = vld [vmem:[%s9 + $0x38] sm:$0xff]
    %v1358 = vld [vmem:[%s9 + $0x40] sm:$0xff]
    %v1359 = vld [vmem:[%s9 + $0x48] sm:$0xff]
    %v1360 = vld [vmem:[%s9 + $0x50] sm:$0xff]
    %v1361 = vld [vmem:[%s9 + $0x58] sm:$0xff]
    %v1362 = vld [vmem:[%s9 + $0x60] sm:$0xff]
    %v1363 = vld [vmem:[%s9 + $0x68] sm:$0xff]
    %v1364 = vld [vmem:[%s9 + $0x70] sm:$0xff]
    %v1365 = vld [vmem:[%s9 + $0x78] sm:$0xff]
    %v1366 = vld [vmem:[%s9 + $0x80] sm:$0xff]
    %v1367 = vld [vmem:[%s9 + $0x88] sm:$0xff]
    %v1368 = vld [vmem:[%s9 + $0x90] sm:$0xff]
    %v1369 = vld [vmem:[%s9 + $0x98] sm:$0xff]
    %v1370 = vld [vmem:[%s9 + $0xa0] sm:$0xff]
    %v1371 = vld [vmem:[%s9 + $0xa8] sm:$0xff]
    %v1372 = vld [vmem:[%s9 + $0xb0] sm:$0xff]
    %v1373 = vld [vmem:[%s9 + $0xb8] sm:$0xff]
    %v1374 = vld [vmem:[%s9 + $0xc0] sm:$0xff]
    %v1375 = vld [vmem:[%s9 + $0xc8] sm:$0xff]
    %v1376 = vld [vmem:[%s9 + $0xd0] sm:$0xff]
    %v1377 = vld [vmem:[%s9 + $0xd8] sm:$0xff]
    %v1379 = vsel %vm980, %v1349, 0
    %1381 = vmatprep.subr.mxu0 0.0
    %1382 = vmatpush1.msra.mxu0 %v1350
    %1383 = vmatprep.subr.mxu0 0.0
    %1384 = vmatpush1.msra.mxu0 %v1351
    %1385 = vmatprep.subr.mxu0 0.0
    %1386 = vmatpush1.msra.mxu0 %v1352
    %1387 = vmatprep.subr.mxu0 0.0
    %1388 = vmatpush1.msra.mxu0 %v1353
    %1389 = vmatprep.subr.mxu0 0.0
    %1390 = vmatpush1.msra.mxu0 %v1354
    %1391 = vmatprep.subr.mxu0 0.0
    %1392 = vmatpush1.msra.mxu0 %v1355
    %1393 = vmatprep.subr.mxu0 0.0
    %1394 = vmatpush1.msra.mxu0 %v1356
    %1395 = vmatprep.subr.mxu0 0.0
    %1396 = vmatpush1.msra.mxu0 %v1357
    %1397 = vmatprep.subr.mxu0 0.0
    %1398 = vmatpush1.msra.mxu0 %v1358
    %1399 = vmatprep.subr.mxu0 0.0
    %1400 = vmatpush1.msra.mxu0 %v1359
    %1401 = vmatprep.subr.mxu0 0.0
    %1402 = vmatpush1.msra.mxu0 %v1360
    %1403 = vmatprep.subr.mxu0 0.0
    %1404 = vmatpush1.msra.mxu0 %v1361
    %1405 = vmatprep.subr.mxu0 0.0
    %1406 = vmatpush1.msra.mxu0 %v1362
    %1407 = vmatprep.subr.mxu0 0.0
    %1408 = vmatpush1.msra.mxu0 %v1363
    %1409 = vmatprep.subr.mxu0 0.0
    %1410 = vmatpush1.msra.mxu0 %v1364
    %1411 = vmatprep.subr.mxu0 0.0
    %1412 = vmatpush1.msra.mxu0 %v1365
    %1413 = vmatprep.subr.mxu0 0.0
    %1414 = vmatpush1.msra.mxu0 %v1366
    %1415 = vmatprep.subr.mxu0 0.0
    %1416 = vmatpush1.msra.mxu0 %v1367
    %1417 = vmatprep.subr.mxu0 0.0
    %1418 = vmatpush1.msra.mxu0 %v1368
    %1419 = vmatprep.subr.mxu0 0.0
    %1420 = vmatpush1.msra.mxu0 %v1369
    %1421 = vmatprep.subr.mxu0 0.0
    %1422 = vmatpush1.msra.mxu0 %v1370
    %1423 = vmatprep.subr.mxu0 0.0
    %1424 = vmatpush1.msra.mxu0 %v1371
    %1425 = vmatprep.subr.mxu0 0.0
    %1426 = vmatpush1.msra.mxu0 %v1372
    %1427 = vmatprep.subr.mxu0 0.0
    %1428 = vmatpush1.msra.mxu0 %v1373
    %1429 = vmatprep.subr.mxu0 0.0
    %1430 = vmatpush1.msra.mxu0 %v1374
    %1431 = vmatprep.subr.mxu0 0.0
    %1432 = vmatpush1.msra.mxu0 %v1375
    %1433 = vmatprep.subr.mxu0 0.0
    %1434 = vmatpush1.msra.mxu0 %v1376
    %1435 = vmatprep.subr.mxu0 0.0
    %1436 = vmatpush1.msra.mxu0 %v1377
    %1437 = vmatprep.subr.mxu0 0.0
    %1438 = vmatpush1.msra.mxu0 0.0
    %1439 = vmatprep.subr.mxu0 0.0
    %1440 = vmatpush1.msra.mxu0 0.0
    %1441 = vmatprep.subr.mxu0 0.0
    %1442 = vmatpush1.msra.mxu0 0.0
    %1443 = vmatprep.subr.mxu0 0.0
    %1444 = vmatpush1.msra.mxu0 0.0
    %1445 = vmatprep.mubr.f32.mxu0 %v1379
    %1446 = vmatmul.mubr.f32.gmra.mrb[0].mxu0 %v1348
    %v1447 = vpop.f32.mrb[0].mxu0
    %v1448 = vadd.f32 0.0, %v1447
    %v1449 = vpop.f32.mrb[0].mxu0
    %1450 = vdwg.mxu0
    %v1451 = vld [vmem:[%s10] sm:$0xff]
    %v1452 = vld [vmem:[%s10 + $0x8] sm:$0xff]
    %v1453 = vld [vmem:[%s10 + $0x10] sm:$0xff]
    %v1454 = vld [vmem:[%s10 + $0x18] sm:$0xff]
    %v1455 = vld [vmem:[%s11] sm:$0xff]
    %v1456 = vld [vmem:[%s11 + $0x8] sm:$0xff]
    %v1457 = vld [vmem:[%s11 + $0x10] sm:$0xff]
    %v1458 = vld [vmem:[%s11 + $0x18] sm:$0xff]
    %v1460 = vsel %vm247, %v1448, 0
    %1462 = vmatprep.subr.mxu0 0.0
    %1463 = vmatpush1.msra.mxu0 %v1455
    %1464 = vmatprep.subr.mxu0 0.0
    %1465 = vmatpush1.msra.mxu0 %v1456
    %1466 = vmatprep.subr.mxu0 0.0
    %1467 = vmatpush1.msra.mxu0 %v1457
    %1468 = vmatprep.subr.mxu0 0.0
    %1469 = vmatpush1.msra.mxu0 %v1458
    %1470 = vmatprep.subr.mxu0 0.0
    %1471 = vmatpush1.msra.mxu0 0.0
    %1472 = vmatprep.subr.mxu0 0.0
    %1473 = vmatpush1.msra.mxu0 0.0
    %1474 = vmatprep.subr.mxu0 0.0
    %1475 = vmatpush1.msra.mxu0 0.0
    %1476 = vmatprep.subr.mxu0 0.0
    %1477 = vmatpush1.msra.mxu0 0.0
    %1478 = vmatprep.subr.mxu0 0.0
    %1479 = vmatpush1.msra.mxu0 0.0
    %1480 = vmatprep.subr.mxu0 0.0
    %1481 = vmatpush1.msra.mxu0 0.0
    %1482 = vmatprep.subr.mxu0 0.0
    %1483 = vmatpush1.msra.mxu0 0.0
    %1484 = vmatprep.subr.mxu0 0.0
    %1485 = vmatpush1.msra.mxu0 0.0
    %1486 = vmatprep.subr.mxu0 0.0
    %1487 = vmatpush1.msra.mxu0 0.0
    %1488 = vmatprep.subr.mxu0 0.0
    %1489 = vmatpush1.msra.mxu0 0.0
    %1490 = vmatprep.subr.mxu0 0.0
    %1491 = vmatpush1.msra.mxu0 0.0
    %1492 = vmatprep.subr.mxu0 0.0
    %1493 = vmatpush1.msra.mxu0 0.0
    %1494 = vmatprep.subr.mxu0 0.0
    %1495 = vmatpush1.msra.mxu0 0.0
    %1496 = vmatprep.subr.mxu0 0.0
    %1497 = vmatpush1.msra.mxu0 0.0
    %1498 = vmatprep.subr.mxu0 0.0
    %1499 = vmatpush1.msra.mxu0 0.0
    %1500 = vmatprep.subr.mxu0 0.0
    %1501 = vmatpush1.msra.mxu0 0.0
    %1502 = vmatprep.subr.mxu0 0.0
    %1503 = vmatpush1.msra.mxu0 0.0
    %1504 = vmatprep.subr.mxu0 0.0
    %1505 = vmatpush1.msra.mxu0 0.0
    %1506 = vmatprep.subr.mxu0 0.0
    %1507 = vmatpush1.msra.mxu0 0.0
    %1508 = vmatprep.subr.mxu0 0.0
    %1509 = vmatpush1.msra.mxu0 0.0
    %1510 = vmatprep.subr.mxu0 0.0
    %1511 = vmatpush1.msra.mxu0 0.0
    %1512 = vmatprep.subr.mxu0 0.0
    %1513 = vmatpush1.msra.mxu0 0.0
    %1514 = vmatprep.subr.mxu0 0.0
    %1515 = vmatpush1.msra.mxu0 0.0
    %1516 = vmatprep.subr.mxu0 0.0
    %1517 = vmatpush1.msra.mxu0 0.0
    %1518 = vmatprep.subr.mxu0 0.0
    %1519 = vmatpush1.msra.mxu0 0.0
    %1520 = vmatprep.subr.mxu0 0.0
    %1521 = vmatpush1.msra.mxu0 0.0
    %1522 = vmatprep.subr.mxu0 0.0
    %1523 = vmatpush1.msra.mxu0 0.0
    %1524 = vmatprep.subr.mxu0 0.0
    %1525 = vmatpush1.msra.mxu0 0.0
    %1526 = vmatprep.mubr.f32.mxu0 0.0
    %1527 = vmatmul.mubr.f32.gmra.mrb[0].mxu0 %v1460
    %v1528 = vpop.f32.mrb[0].mxu0
    %v1529 = vadd.f32 0.0, %v1528
    %v1530 = vpop.f32.mrb[0].mxu0
    %1531 = vdwg.mxu0
    %1532 = vmatprep.subr.mxu0 0.0
    %1533 = vmatpush1.msra.mxu0 %v1451
    %1534 = vmatprep.subr.mxu0 0.0
    %1535 = vmatpush1.msra.mxu0 %v1452
    %1536 = vmatprep.subr.mxu0 0.0
    %1537 = vmatpush1.msra.mxu0 %v1453
    %1538 = vmatprep.subr.mxu0 0.0
    %1539 = vmatpush1.msra.mxu0 %v1454
    %1540 = vmatprep.subr.mxu0 0.0
    %1541 = vmatpush1.msra.mxu0 0.0
    %1542 = vmatprep.subr.mxu0 0.0
    %1543 = vmatpush1.msra.mxu0 0.0
    %1544 = vmatprep.subr.mxu0 0.0
    %1545 = vmatpush1.msra.mxu0 0.0
    %1546 = vmatprep.subr.mxu0 0.0
    %1547 = vmatpush1.msra.mxu0 0.0
    %1548 = vmatprep.subr.mxu0 0.0
    %1549 = vmatpush1.msra.mxu0 0.0
    %1550 = vmatprep.subr.mxu0 0.0
    %1551 = vmatpush1.msra.mxu0 0.0
    %1552 = vmatprep.subr.mxu0 0.0
    %1553 = vmatpush1.msra.mxu0 0.0
    %1554 = vmatprep.subr.mxu0 0.0
    %1555 = vmatpush1.msra.mxu0 0.0
    %1556 = vmatprep.subr.mxu0 0.0
    %1557 = vmatpush1.msra.mxu0 0.0
    %1558 = vmatprep.subr.mxu0 0.0
    %1559 = vmatpush1.msra.mxu0 0.0
    %1560 = vmatprep.subr.mxu0 0.0
    %1561 = vmatpush1.msra.mxu0 0.0
    %1562 = vmatprep.subr.mxu0 0.0
    %1563 = vmatpush1.msra.mxu0 0.0
    %1564 = vmatprep.subr.mxu0 0.0
    %1565 = vmatpush1.msra.mxu0 0.0
    %1566 = vmatprep.subr.mxu0 0.0
    %1567 = vmatpush1.msra.mxu0 0.0
    %1568 = vmatprep.subr.mxu0 0.0
    %1569 = vmatpush1.msra.mxu0 0.0
    %1570 = vmatprep.subr.mxu0 0.0
    %1571 = vmatpush1.msra.mxu0 0.0
    %1572 = vmatprep.subr.mxu0 0.0
    %1573 = vmatpush1.msra.mxu0 0.0
    %1574 = vmatprep.subr.mxu0 0.0
    %1575 = vmatpush1.msra.mxu0 0.0
    %1576 = vmatprep.subr.mxu0 0.0
    %1577 = vmatpush1.msra.mxu0 0.0
    %1578 = vmatprep.subr.mxu0 0.0
    %1579 = vmatpush1.msra.mxu0 0.0
    %1580 = vmatprep.subr.mxu0 0.0
    %1581 = vmatpush1.msra.mxu0 0.0
    %1582 = vmatprep.subr.mxu0 0.0
    %1583 = vmatpush1.msra.mxu0 0.0
    %1584 = vmatprep.subr.mxu0 0.0
    %1585 = vmatpush1.msra.mxu0 0.0
    %1586 = vmatprep.subr.mxu0 0.0
    %1587 = vmatpush1.msra.mxu0 0.0
    %1588 = vmatprep.subr.mxu0 0.0
    %1589 = vmatpush1.msra.mxu0 0.0
    %1590 = vmatprep.subr.mxu0 0.0
    %1591 = vmatpush1.msra.mxu0 0.0
    %1592 = vmatprep.subr.mxu0 0.0
    %1593 = vmatpush1.msra.mxu0 0.0
    %1594 = vmatprep.subr.mxu0 0.0
    %1595 = vmatpush1.msra.mxu0 0.0
    %1596 = vmatprep.mubr.f32.mxu0 0.0
    %1597 = vmatmul.mubr.f32.gmra.mrb[0].mxu0 %v1092
    %v1598 = vpop.f32.mrb[0].mxu0
    %v1599 = vadd.f32 %v1529, %v1598
    %v1600 = vpop.f32.mrb[0].mxu0
    %1601 = vdwg.mxu0
    %v1602 = vld [vmem:[%s12] sm:$0x1]
    %v1604 = vlaneseq
    %v1605 = vshrl.u32 %v1604, 7
    %v1606 = vsub.s32 0, %v1605
    %v1607 = vrot.slane %v1602, %v1606
    %v1609 = vadd.f32 %v1599, %v1607
    %v1610 = vxor.u32 %v1609, 2147483648
    %v1611 = vmul.f32 %v1610, 1.442695
    %v1612 = vpow.pop %v1611
    %v1613 = vadd.f32 %v1612, 1.0
    %v1614 = vrcp.pop %v1613
    %v1615 = vmul.f32 1.0, %v1614
    %1616 = vst.msk [vmem:[#allocation5] sm:$0xff] %vm89, %v1615
    %v1617 = vld [vmem:[%s13] sm:$0xff]
    %v1618 = vld [vmem:[%s13 + $0x8] sm:$0xff]
    %v1619 = vld [vmem:[%s13 + $0x10] sm:$0xff]
    %v1620 = vld [vmem:[%s13 + $0x18] sm:$0xff]
    %v1621 = vld [vmem:[%s13 + $0x20] sm:$0xff]
    %v1622 = vld [vmem:[%s13 + $0x28] sm:$0xff]
    %v1623 = vld [vmem:[%s13 + $0x30] sm:$0xff]
    %v1624 = vld [vmem:[%s13 + $0x38] sm:$0xff]
    %v1625 = vld [vmem:[%s13 + $0x40] sm:$0xff]
    %v1626 = vld [vmem:[%s13 + $0x48] sm:$0xff]
    %v1627 = vld [vmem:[%s13 + $0x50] sm:$0xff]
    %v1628 = vld [vmem:[%s13 + $0x58] sm:$0xff]
    %v1629 = vld [vmem:[%s13 + $0x60] sm:$0xff]
    %v1630 = vld [vmem:[%s13 + $0x68] sm:$0xff]
    %v1631 = vld [vmem:[%s13 + $0x70] sm:$0xff]
    %v1632 = vld [vmem:[%s13 + $0x78] sm:$0xff]
    %v1633 = vld [vmem:[%s13 + $0x80] sm:$0xff]
    %v1634 = vld [vmem:[%s13 + $0x88] sm:$0xff]
    %v1635 = vld [vmem:[%s13 + $0x90] sm:$0xff]
    %v1636 = vld [vmem:[%s13 + $0x98] sm:$0xff]
    %v1637 = vld [vmem:[%s13 + $0xa0] sm:$0xff]
    %v1638 = vld [vmem:[%s13 + $0xa8] sm:$0xff]
    %v1639 = vld [vmem:[%s13 + $0xb0] sm:$0xff]
    %v1640 = vld [vmem:[%s13 + $0xb8] sm:$0xff]
    %v1641 = vld [vmem:[%s13 + $0xc0] sm:$0xff]
    %v1642 = vld [vmem:[%s13 + $0xc8] sm:$0xff]
    %v1643 = vld [vmem:[%s13 + $0xd0] sm:$0xff]
    %v1644 = vld [vmem:[%s13 + $0xd8] sm:$0xff]
    %v1645 = vld [vmem:[%s13 + $0xe0] sm:$0xff]
    %v1646 = vld [vmem:[%s13 + $0xe8] sm:$0xff]
    %v1647 = vld [vmem:[%s13 + $0xf0] sm:$0xff]
    %v1648 = vld [vmem:[%s13 + $0xf8] sm:$0xff]
    %v1649 = vld [vmem:[%s13 + $0x100] sm:$0xff]
    %v1650 = vld [vmem:[%s13 + $0x108] sm:$0xff]
    %v1651 = vld [vmem:[%s13 + $0x110] sm:$0xff]
    %v1652 = vld [vmem:[%s13 + $0x118] sm:$0xff]
    %v1653 = vld [vmem:[%s13 + $0x120] sm:$0xff]
    %v1654 = vld [vmem:[%s13 + $0x128] sm:$0xff]
    %v1655 = vld [vmem:[%s13 + $0x130] sm:$0xff]
    %v1656 = vld [vmem:[%s13 + $0x138] sm:$0xff]
    %v1657 = vld [vmem:[%s13 + $0x140] sm:$0xff]
    %v1658 = vld [vmem:[%s13 + $0x148] sm:$0xff]
    %v1659 = vld [vmem:[%s13 + $0x150] sm:$0xff]
    %v1660 = vld [vmem:[%s13 + $0x158] sm:$0xff]
    %v1661 = vld [vmem:[%s13 + $0x160] sm:$0xff]
    %v1662 = vld [vmem:[%s13 + $0x168] sm:$0xff]
    %v1663 = vld [vmem:[%s13 + $0x170] sm:$0xff]
    %v1664 = vld [vmem:[%s13 + $0x178] sm:$0xff]
    %v1665 = vld [vmem:[%s13 + $0x180] sm:$0xff]
    %v1666 = vld [vmem:[%s13 + $0x188] sm:$0xff]
    %v1667 = vld [vmem:[%s13 + $0x190] sm:$0xff]
    %v1668 = vld [vmem:[%s13 + $0x198] sm:$0xff]
    %v1669 = vld [vmem:[%s13 + $0x1a0] sm:$0xff]
    %v1670 = vld [vmem:[%s13 + $0x1a8] sm:$0xff]
    %v1671 = vld [vmem:[%s13 + $0x1b0] sm:$0xff]
    %v1672 = vld [vmem:[%s13 + $0x1b8] sm:$0xff]
    %v1673 = vld [vmem:[%s13 + $0x1c0] sm:$0xff]
    %v1674 = vld [vmem:[%s13 + $0x1c8] sm:$0xff]
    %v1675 = vld [vmem:[%s13 + $0x1d0] sm:$0xff]
    %v1676 = vld [vmem:[%s13 + $0x1d8] sm:$0xff]
    %v1677 = vld [vmem:[%s13 + $0x1e0] sm:$0xff]
    %v1678 = vld [vmem:[%s13 + $0x1e8] sm:$0xff]
    %v1679 = vld [vmem:[%s13 + $0x1f0] sm:$0xff]
    %v1680 = vld [vmem:[%s13 + $0x1f8] sm:$0xff]
    %v1681 = vld [vmem:[%s14] sm:$0x3]
    %v1683 = vlaneseq
    %v1684 = vshrl.u32 %v1683, 7
    %v1685 = vsub.s32 0, %v1684
    %v1686 = vrot.slane %v1681, %v1685
    %v1687 = vlaneseq
    %v1688 = vshrl.u32 %v1687, 7
    %v1689 = vsub.s32 1, %v1688
    %v1690 = vrot.slane %v1681, %v1689
    %1693 = vmatprep.subr.mxu0 %v1618
    %1694 = vmatpush1.msra.mxu0 %v1617
    %1695 = vmatprep.subr.mxu0 %v1620
    %1696 = vmatpush1.msra.mxu0 %v1619
    %1697 = vmatprep.subr.mxu0 %v1622
    %1698 = vmatpush1.msra.mxu0 %v1621
    %1699 = vmatprep.subr.mxu0 %v1624
    %1700 = vmatpush1.msra.mxu0 %v1623
    %1701 = vmatprep.subr.mxu0 %v1626
    %1702 = vmatpush1.msra.mxu0 %v1625
    %1703 = vmatprep.subr.mxu0 %v1628
    %1704 = vmatpush1.msra.mxu0 %v1627
    %1705 = vmatprep.subr.mxu0 %v1630
    %1706 = vmatpush1.msra.mxu0 %v1629
    %1707 = vmatprep.subr.mxu0 %v1632
    %1708 = vmatpush1.msra.mxu0 %v1631
    %1709 = vmatprep.subr.mxu0 %v1634
    %1710 = vmatpush1.msra.mxu0 %v1633
    %1711 = vmatprep.subr.mxu0 %v1636
    %1712 = vmatpush1.msra.mxu0 %v1635
    %1713 = vmatprep.subr.mxu0 %v1638
    %1714 = vmatpush1.msra.mxu0 %v1637
    %1715 = vmatprep.subr.mxu0 %v1640
    %1716 = vmatpush1.msra.mxu0 %v1639
    %1717 = vmatprep.subr.mxu0 %v1642
    %1718 = vmatpush1.msra.mxu0 %v1641
    %1719 = vmatprep.subr.mxu0 %v1644
    %1720 = vmatpush1.msra.mxu0 %v1643
    %1721 = vmatprep.subr.mxu0 %v1646
    %1722 = vmatpush1.msra.mxu0 %v1645
    %1723 = vmatprep.subr.mxu0 %v1648
    %1724 = vmatpush1.msra.mxu0 %v1647
    %1725 = vmatprep.subr.mxu0 %v1650
    %1726 = vmatpush1.msra.mxu0 %v1649
    %1727 = vmatprep.subr.mxu0 %v1652
    %1728 = vmatpush1.msra.mxu0 %v1651
    %1729 = vmatprep.subr.mxu0 %v1654
    %1730 = vmatpush1.msra.mxu0 %v1653
    %1731 = vmatprep.subr.mxu0 %v1656
    %1732 = vmatpush1.msra.mxu0 %v1655
    %1733 = vmatprep.subr.mxu0 %v1658
    %1734 = vmatpush1.msra.mxu0 %v1657
    %1735 = vmatprep.subr.mxu0 %v1660
    %1736 = vmatpush1.msra.mxu0 %v1659
    %1737 = vmatprep.subr.mxu0 %v1662
    %1738 = vmatpush1.msra.mxu0 %v1661
    %1739 = vmatprep.subr.mxu0 %v1664
    %1740 = vmatpush1.msra.mxu0 %v1663
    %1741 = vmatprep.subr.mxu0 %v1666
    %1742 = vmatpush1.msra.mxu0 %v1665
    %1743 = vmatprep.subr.mxu0 %v1668
    %1744 = vmatpush1.msra.mxu0 %v1667
    %1745 = vmatprep.subr.mxu0 %v1670
    %1746 = vmatpush1.msra.mxu0 %v1669
    %1747 = vmatprep.subr.mxu0 %v1672
    %1748 = vmatpush1.msra.mxu0 %v1671
    %1749 = vmatprep.subr.mxu0 %v1674
    %1750 = vmatpush1.msra.mxu0 %v1673
    %1751 = vmatprep.subr.mxu0 %v1676
    %1752 = vmatpush1.msra.mxu0 %v1675
    %1753 = vmatprep.subr.mxu0 %v1678
    %1754 = vmatpush1.msra.mxu0 %v1677
    %1755 = vmatprep.subr.mxu0 %v1680
    %1756 = vmatpush1.msra.mxu0 %v1679
    %1757 = vmatprep.mubr.f32.mxu0 %v984
    %1758 = vmatmul.mubr.f32.gmra.mrb[0].mxu0 %v981
    %v1759 = vpop.f32.mrb[0].mxu0
    %v1760 = vadd.f32 %v1686, %v1759
    %v1761 = vpop.f32.mrb[0].mxu0
    %v1762 = vadd.f32 %v1690, %v1761
    %1763 = vdwg.mxu0
    %1764 = vst [vmem:[#allocation6] sm:$0xff] %v1760
    %1765 = vst [vmem:[#allocation6 + $0x8] sm:$0xff] %v1762
    // Predicated region
    $region66: #{tpu_custom_call.1} parent=1 // pred_check
      _
    $region67: #{tpu_custom_call.1} parent=1 // pred_check_branch
      %1767 = sbr.rel (0) target = $region69
    $region68: #{tpu_custom_call.1} parent=1 // pred_region
      %s1769 = ssub.s32 128, 128
      %1770 = vsyncadd [#allocation4], %s1769
      %s1772 = sshll.u32 [#allocation5], 4
      %s1773 = int_to_ptr.vmem [resolvable:$true] %s1772
      %1775 = dma.vmem_to_hbm [thread:$0]  %s1773, 128, %s15, [#allocation4]
    $region69: #{tpu_custom_call.1} parent=1 // pred_fallthru
      _
    // Predicated region
    $region70: #{tpu_custom_call.1} parent=1 // pred_check
      _
    $region71: #{tpu_custom_call.1} parent=1 // pred_check_branch
      %1777 = sbr.rel (0) target = $region73
    $region72: #{tpu_custom_call.1} parent=1 // pred_region
      %s1779 = ssub.s32 256, 256
      %1780 = vsyncadd [#allocation7], %s1779
      %s1782 = sshll.u32 [#allocation6], 4
      %s1783 = int_to_ptr.vmem [resolvable:$true] %s1782
      %1785 = dma.vmem_to_hbm [thread:$0]  %s1783, 256, %s16, [#allocation7]
    $region73: #{tpu_custom_call.1} parent=1 // pred_fallthru
      _
    // Predicated region
    $region74: #{tpu_custom_call.1} parent=1 // pred_check
      _
    $region75: #{tpu_custom_call.1} parent=1 // pred_check_branch
      %1787 = sbr.rel (0) target = $region77
    $region76: #{tpu_custom_call.1} parent=1 // pred_region
      %1788 = dma.done [#allocation4], 128
    $region77: #{tpu_custom_call.1} parent=1 // pred_fallthru
      _
    // Predicated region
    $region78: #{tpu_custom_call.1} parent=1 // pred_check
      _
    $region79: #{tpu_custom_call.1} parent=1 // pred_check_branch
      %1790 = sbr.rel (0) target = $region81
    $region80: #{tpu_custom_call.1} parent=1 // pred_region
      %1791 = dma.done [#allocation7], 256
    $region81: #{tpu_custom_call.1} parent=1 // pred_fallthru
      _
    %1792 = vsyncpa [#allocation3], 1
    %1793 = vsyncpa [#allocation4], 1
    %1794 = vsyncpa [#allocation7], 1

</llo_original>
